<compile_context>
chip_gen: v7x
topology: tpu7x:2x2x1
jax: 0.10.0
libtpu: 0.0.40
codegen_flags: <defaults>
</compile_context>

<pallas_src>
import jax
import jax.numpy as jnp
import numpy as np
from jax import lax
from jax.experimental import pallas as pl
from jax.experimental.pallas import tpu as pltpu

BBLK = 8  # batch rows processed per grid step (== sublane count)


# ----------------------------------------------------------------------------
# Pallas kernel: one batch block (BBLK rows) per grid step.
# ----------------------------------------------------------------------------
def _attn_lstm_kernel(x_ref, mask_ref,
                      wih_f_ref, wih_b_ref, bf_ref, bb_ref, whh_ref,
                      ln_g_ref, ln_b_ref, w1_ref, b1_ref, w2_ref, b2_ref,
                      pooled_ref, attn_ref,
                      gin_f_ref, gin_b_ref, y_ref):
    TB, D = x_ref.shape                  # TB = T * BBLK, row r = t*BBLK + j
    T, Bblk, _ = mask_ref.shape          # mask: (T, Bblk, 1)
    H = D // 2

    x2 = x_ref[...]                                             # (T*Bblk, D)

    # ---- hoisted input projections: one big MXU matmul per direction.
    # wih_f_i has the backward-direction gate columns zeroed (and vice versa),
    # so gin_f / gin_b can simply be added inside the recurrence.
    gin_f_ref[...] = (jnp.dot(x2, wih_f_ref[...],
                              preferred_element_type=jnp.float32) + bf_ref[...])
    gin_b_ref[...] = (jnp.dot(x2, wih_b_ref[...],
                              preferred_element_type=jnp.float32) + bb_ref[...])

    whh = whh_ref[...]                                          # (D, 8H) block-structured

    def step(s, carry):
        # h/c: (Bblk, D) with [:, :H] = forward state, [:, H:] = backward state
        h, c = carry
        t_b = T - 1 - s
        row_f = pl.multiple_of(s * Bblk, Bblk)
        row_b = pl.multiple_of(t_b * Bblk, Bblk)

        g = (gin_f_ref[pl.ds(row_f, Bblk), :]
             + gin_b_ref[pl.ds(row_b, Bblk), :]
             + jnp.dot(h, whh, preferred_element_type=jnp.float32))  # (Bblk, 8H)

        # fused gate layout: [i_f i_b | f_f f_b | g_f g_b | o_f o_b]
        i_g = jax.nn.sigmoid(g[:, 0:2 * H])
        f_g = jax.nn.sigmoid(g[:, 2 * H:4 * H])
        g_g = jnp.tanh(g[:, 4 * H:6 * H])
        o_g = jax.nn.sigmoid(g[:, 6 * H:8 * H])

        c_new = f_g * c + i_g * g_g
        h_new = o_g * jnp.tanh(c_new)

        # forward half is the hidden state at time s, backward half at T-1-s
        y_ref[pl.ds(row_f, Bblk), 0:H] = h_new[:, 0:H]
        y_ref[pl.ds(row_b, Bblk), H:2 * H] = h_new[:, H:2 * H]
        return (h_new, c_new)

    h0 = jnp.zeros((Bblk, D), jnp.float32)
    c0 = jnp.zeros((Bblk, D), jnp.float32)
    lax.fori_loop(0, T, step, (h0, c0), unroll=True if T <= 32 else 4)

    # ---- post-LSTM: activation + LayerNorm + attention MLP on the full slab
    y2 = y_ref[...]                                             # (T*Bblk, D)
    act = y2 * jnp.tanh(jax.nn.softplus(y2)) + jax.nn.sigmoid(y2) + jnp.tanh(y2)

    mean = jnp.mean(act, axis=-1, keepdims=True)
    var = jnp.mean(jnp.square(act - mean), axis=-1, keepdims=True)
    xn2 = (act - mean) * lax.rsqrt(var + 1e-5)
    xn2 = xn2 * ln_g_ref[...] + ln_b_ref[...]                   # (1, D) broadcasts

    z2 = jnp.tanh(jnp.dot(xn2, w1_ref[...],
                          preferred_element_type=jnp.float32) + b1_ref[...])

    # (T*Bblk, D) -> (T, Bblk, D): Bblk == 8 so this is a pure retile
    xn3 = xn2.reshape(T, Bblk, D)
    z3 = z2.reshape(T, Bblk, D)

    # second attention layer (D -> 1) as a lane reduction
    logits = jnp.sum(z3 * w2_ref[...], axis=-1, keepdims=True) + b2_ref[...]  # (T, Bblk, 1)
    logits = jnp.where(mask_ref[...] > 0.0, logits, -jnp.inf)

    # softmax over time
    m = jnp.max(logits, axis=0, keepdims=True)
    e = jnp.exp(logits - m)
    a = e / jnp.sum(e, axis=0, keepdims=True)                   # (T, Bblk, 1)

    attn_ref[...] = a.astype(attn_ref.dtype)
    pooled_ref[...] = jnp.sum(xn3 * a, axis=0).astype(pooled_ref.dtype)


# ----------------------------------------------------------------------------
# Wrapper (weight fusion + batch blocking + pallas_call)
# ----------------------------------------------------------------------------
def attention_lstm_forward(x, mask, params):
    B, T, D = x.shape
    H = D // 2
    G = 8 * H
    x = x.astype(jnp.float32)

    if mask is None:
        mask_f = jnp.ones((B, T), jnp.float32)
    else:
        mask_f = mask.astype(jnp.float32)

    # --- pad batch to a multiple of BBLK and rearrange into time-major blocks
    Bblk = BBLK
    Bp = ((B + Bblk - 1) // Bblk) * Bblk
    nb = Bp // Bblk
    pad = Bp - B
    if pad:
        x_p = jnp.concatenate([x, jnp.zeros((pad, T, D), jnp.float32)], axis=0)
        m_p = jnp.concatenate([mask_f, jnp.ones((pad, T), jnp.float32)], axis=0)
    else:
        x_p, m_p = x, mask_f

    # (Bp, T, D) -> (nb, T*Bblk, D), row r = t*Bblk + j inside a block
    x_blk = (x_p.reshape(nb, Bblk, T, D)
                 .transpose(0, 2, 1, 3)
                 .reshape(nb, T * Bblk, D))
    # (Bp, T) -> (nb, T, Bblk, 1)
    m_blk = (m_p.reshape(nb, Bblk, T)
                 .transpose(0, 2, 1)
                 .reshape(nb, T, Bblk, 1))

    # --- fuse LSTM weights: interleaved gate layout [i_f i_b f_f f_b g_f g_b o_f o_b]
    def interleave(wf, wb):
        # wf, wb: (R, 4H) in PyTorch gate-block order [i|f|g|o] -> (R, 8H)
        R = wf.shape[0]
        return jnp.stack([wf.reshape(R, 4, H), wb.reshape(R, 4, H)],
                         axis=2).reshape(R, G)

    zD4 = jnp.zeros((D, 4 * H), jnp.float32)
    zH4 = jnp.zeros((H, 4 * H), jnp.float32)
    z14 = jnp.zeros((1, 4 * H), jnp.float32)

    wih_f_i = interleave(params['w_ih_f'].T.astype(jnp.float32), zD4)   # (D, 8H)
    wih_b_i = interleave(zD4, params['w_ih_b'].T.astype(jnp.float32))   # (D, 8H)
    b_f_i = interleave((params['b_ih_f'] + params['b_hh_f']).reshape(1, 4 * H), z14)
    b_b_i = interleave(z14, (params['b_ih_b'] + params['b_hh_b']).reshape(1, 4 * H))
    whh_i = jnp.concatenate(
        [interleave(params['w_hh_f'].T.astype(jnp.float32), zH4),
         interleave(zH4, params['w_hh_b'].T.astype(jnp.float32))], axis=0)  # (2H, 8H)

    ln_g = params['ln_gamma'].reshape(1, D)
    ln_b = params['ln_beta'].reshape(1, D)
    w1 = params['attn_w1'].T                                    # (D, D)
    b1 = params['attn_b1'].reshape(1, D)
    w2 = params['attn_w2'].reshape(1, D)                        # row vector
    b2 = params['attn_b2'].reshape(1, 1)

    def shared(shape):
        return pl.BlockSpec(shape, lambda i, _s=shape: (0,) * len(_s))

    in_specs = [
        pl.BlockSpec((None, T * Bblk, D), lambda i: (i, 0, 0)),       # x
        pl.BlockSpec((None, T, Bblk, 1), lambda i: (i, 0, 0, 0)),     # mask
        shared(wih_f_i.shape), shared(wih_b_i.shape),
        shared(b_f_i.shape), shared(b_b_i.shape), shared(whh_i.shape),
        shared(ln_g.shape), shared(ln_b.shape),
        shared(w1.shape), shared(b1.shape),
        shared(w2.shape), shared(b2.shape),
    ]
    out_specs = (
        pl.BlockSpec((None, Bblk, D), lambda i: (i, 0, 0)),           # pooled
        pl.BlockSpec((None, T, Bblk, 1), lambda i: (i, 0, 0, 0)),     # attention
    )
    out_shape = (
        jax.ShapeDtypeStruct((nb, Bblk, D), jnp.float32),
        jax.ShapeDtypeStruct((nb, T, Bblk, 1), jnp.float32),
    )

    pooled_blk, attn_blk = pl.pallas_call(
        _attn_lstm_kernel,
        grid=(nb,),
        in_specs=in_specs,
        out_specs=out_specs,
        out_shape=out_shape,
        scratch_shapes=[pltpu.VMEM((T * Bblk, G), jnp.float32),  # fwd input proj
                        pltpu.VMEM((T * Bblk, G), jnp.float32),  # bwd input proj
                        pltpu.VMEM((T * Bblk, D), jnp.float32)], # bi-LSTM outputs
        compiler_params=pltpu.CompilerParams(
            dimension_semantics=("parallel",)),
    )(x_blk, m_blk, wih_f_i, wih_b_i, b_f_i, b_b_i, whh_i,
      ln_g, ln_b, w1, b1, w2, b2)

    pooled = pooled_blk.reshape(Bp, D)[:B]
    attn = attn_blk.transpose(0, 2, 1, 3).reshape(Bp, T, 1)[:B]
    return pooled, attn


# ----------------------------------------------------------------------------
# Deterministic parameter init (shapes match the PyTorch module's __init__)
# ----------------------------------------------------------------------------
def init_params(key, emb_dim):
    H = emb_dim // 2
    ks = jax.random.split(key, 12)
    u = lambda k, shape, s=0.1: jax.random.uniform(k, shape, jnp.float32, -s, s)
    return dict(
        # nn.LSTM(emb_dim, H, bidirectional=True)
        w_ih_f=u(ks[0], (4 * H, emb_dim)),
        w_hh_f=u(ks[1], (4 * H, H)),
        b_ih_f=u(ks[2], (4 * H,)),
        b_hh_f=u(ks[3], (4 * H,)),
        w_ih_b=u(ks[4], (4 * H, emb_dim)),
        w_hh_b=u(ks[5], (4 * H, H)),
        b_ih_b=u(ks[6], (4 * H,)),
        b_hh_b=u(ks[7], (4 * H,)),
        # nn.LayerNorm(emb_dim) default init
        ln_gamma=jnp.ones((emb_dim,), jnp.float32),
        ln_beta=jnp.zeros((emb_dim,), jnp.float32),
        # attn: Linear(emb_dim, emb_dim) -> Tanh -> Linear(emb_dim, 1)
        attn_w1=u(ks[8], (emb_dim, emb_dim)),
        attn_b1=u(ks[9], (emb_dim,)),
        attn_w2=u(ks[10], (1, emb_dim)),
        attn_b2=u(ks[11], (1,)),
    )


# ----------------------------------------------------------------------------
# Pure-JAX reference (mirrors the PyTorch forward) for correctness checking
# ----------------------------------------------------------------------------
def reference_forward(x, mask, params):
    B, T, D = x.shape
    H = D // 2

    def cell(x_t, h, c, wih, whh, b):
        g = x_t @ wih.T + h @ whh.T + b
        i = jax.nn.sigmoid(g[:, :H])
        f = jax.nn.sigmoid(g[:, H:2 * H])
        gg = jnp.tanh(g[:, 2 * H:3 * H])
        o = jax.nn.sigmoid(g[:, 3 * H:])
        c = f * c + i * gg
        h = o * jnp.tanh(c)
        return h, c

    bf = params['b_ih_f'] + params['b_hh_f']
    bb = params['b_ih_b'] + params['b_hh_b']

    h = jnp.zeros((B, H)); c = jnp.zeros((B, H))
    hs_f = []
    for t in range(T):
        h, c = cell(x[:, t], h, c, params['w_ih_f'], params['w_hh_f'], bf)
        hs_f.append(h)
    h = jnp.zeros((B, H)); c = jnp.zeros((B, H))
    hs_b = [None] * T
    for t in range(T - 1, -1, -1):
        h, c = cell(x[:, t], h, c, params['w_ih_b'], params['w_hh_b'], bb)
        hs_b[t] = h
    y = jnp.concatenate([jnp.stack(hs_f, 1), jnp.stack(hs_b, 1)], axis=-1)

    act = y * jnp.tanh(jax.nn.softplus(y)) + jax.nn.sigmoid(y) + jnp.tanh(y)
    mean = act.mean(-1, keepdims=True)
    var = ((act - mean) ** 2).mean(-1, keepdims=True)
    xn = (act - mean) / jnp.sqrt(var + 1e-5) * params['ln_gamma'] + params['ln_beta']

    z = jnp.tanh(xn @ params['attn_w1'].T + params['attn_b1'])
    a = z @ params['attn_w2'].T + params['attn_b2']     # (B, T, 1)
    if mask is not None:
        a = jnp.where(mask[..., None], a, -jnp.inf)
    a = jax.nn.softmax(a, axis=1)
    pooled = jnp.sum(xn * a, axis=1)
    return pooled, a


if __name__ == "__main__":
    B, T, D = 2, 8, 32        # batch, sequence, emb_dim (hidden per dir = 16)
    key = jax.random.PRNGKey(0)
    kx, kp = jax.random.split(key)
    x = jax.random.normal(kx, (B, T, D), jnp.float32)
    params = init_params(kp, D)

    # --- no mask ---
    pooled, attn = attention_lstm_forward(x, None, params)
    pooled = jax.block_until_ready(pooled)
    attn = jax.block_until_ready(attn)
    assert pooled.shape == (B, D) and attn.shape == (B, T, 1)
    assert bool(jnp.all(jnp.isfinite(pooled))) and bool(jnp.all(jnp.isfinite(attn)))

    ref_pooled, ref_attn = reference_forward(x, None, params)
    np.testing.assert_allclose(np.asarray(pooled), np.asarray(ref_pooled),
                               rtol=2e-3, atol=2e-3)
    np.testing.assert_allclose(np.asarray(attn), np.asarray(ref_attn),
                               rtol=2e-3, atol=2e-3)

    # --- with a padding mask (variable valid lengths) ---
    lengths = jnp.array([T, 5], dtype=jnp.int32)
    mask = (jnp.arange(T)[None, :] < lengths[:, None])          # (B, T) bool
    pooled_m, attn_m = attention_lstm_forward(x, mask, params)
    pooled_m = jax.block_until_ready(pooled_m)
    attn_m = jax.block_until_ready(attn_m)
    ref_pooled_m, ref_attn_m = reference_forward(x, mask, params)
    np.testing.assert_allclose(np.asarray(pooled_m), np.asarray(ref_pooled_m),
                               rtol=2e-3, atol=2e-3)
    np.testing.assert_allclose(np.asarray(attn_m), np.asarray(ref_attn_m),
                               rtol=2e-3, atol=2e-3)

    print("KERNEL_OK")
</pallas_src>

<mosaic_0001>
module attributes {stable_mosaic.version = 11 : i64} {
  func.func @_attn_lstm_kernel(%arg0: i32, %arg1: memref<1x64x32xf32, #tpu.memory_space<vmem>>, %arg2: memref<1x8x8x1xf32, #tpu.memory_space<vmem>>, %arg3: memref<32x128xf32, #tpu.memory_space<vmem>>, %arg4: memref<32x128xf32, #tpu.memory_space<vmem>>, %arg5: memref<1x128xf32, #tpu.memory_space<vmem>>, %arg6: memref<1x128xf32, #tpu.memory_space<vmem>>, %arg7: memref<32x128xf32, #tpu.memory_space<vmem>>, %arg8: memref<1x32xf32, #tpu.memory_space<vmem>>, %arg9: memref<1x32xf32, #tpu.memory_space<vmem>>, %arg10: memref<32x32xf32, #tpu.memory_space<vmem>>, %arg11: memref<1x32xf32, #tpu.memory_space<vmem>>, %arg12: memref<1x32xf32, #tpu.memory_space<vmem>>, %arg13: memref<1x1xf32, #tpu.memory_space<vmem>>, %arg14: memref<1x8x32xf32, #tpu.memory_space<vmem>>, %arg15: memref<1x8x8x1xf32, #tpu.memory_space<vmem>>, %arg16: memref<64x128xf32, #tpu.memory_space<vmem>>, %arg17: memref<64x128xf32, #tpu.memory_space<vmem>>, %arg18: memref<64x32xf32, #tpu.memory_space<vmem>>) attributes {dimension_semantics = [#tpu.dimension_semantics<parallel>], iteration_bounds = array<i64: 1>, scalar_prefetch = 0 : i64, scratch_operands = 3 : i64, tpu.core_type = #tpu.core_type<tc>, window_params = [{transform_indices = @transform_0, window_bounds = array<i64: 1, 64, 32>}, {transform_indices = @transform_1, window_bounds = array<i64: 1, 8, 8, 1>}, {pipeline_mode = #tpu.pipeline_mode<synchronous>, transform_indices = @transform_2, window_bounds = array<i64: 32, 128>}, {pipeline_mode = #tpu.pipeline_mode<synchronous>, transform_indices = @transform_3, window_bounds = array<i64: 32, 128>}, {pipeline_mode = #tpu.pipeline_mode<synchronous>, transform_indices = @transform_4, window_bounds = array<i64: 1, 128>}, {pipeline_mode = #tpu.pipeline_mode<synchronous>, transform_indices = @transform_5, window_bounds = array<i64: 1, 128>}, {pipeline_mode = #tpu.pipeline_mode<synchronous>, transform_indices = @transform_6, window_bounds = array<i64: 32, 128>}, {pipeline_mode = #tpu.pipeline_mode<synchronous>, transform_indices = @transform_7, window_bounds = array<i64: 1, 32>}, {pipeline_mode = #tpu.pipeline_mode<synchronous>, transform_indices = @transform_8, window_bounds = array<i64: 1, 32>}, {pipeline_mode = #tpu.pipeline_mode<synchronous>, transform_indices = @transform_9, window_bounds = array<i64: 32, 32>}, {pipeline_mode = #tpu.pipeline_mode<synchronous>, transform_indices = @transform_10, window_bounds = array<i64: 1, 32>}, {pipeline_mode = #tpu.pipeline_mode<synchronous>, transform_indices = @transform_11, window_bounds = array<i64: 1, 32>}, {pipeline_mode = #tpu.pipeline_mode<synchronous>, transform_indices = @transform_12, window_bounds = array<i64: 1, 1>}, {transform_indices = @transform_13, window_bounds = array<i64: 1, 8, 32>}, {transform_indices = @transform_14, window_bounds = array<i64: 1, 8, 8, 1>}]} {
    %c0 = arith.constant 0 : index
    %c0_0 = arith.constant 0 : index
    %c0_1 = arith.constant 0 : index
    %0 = vector.load %arg1[%c0, %c0_0, %c0_1] : memref<1x64x32xf32, #tpu.memory_space<vmem>>, vector<1x64x32xf32>
    %1 = vector.shape_cast %0 : vector<1x64x32xf32> to vector<64x32xf32>
    %c0_2 = arith.constant 0 : index
    %c0_3 = arith.constant 0 : index
    %2 = vector.load %arg3[%c0_2, %c0_3] : memref<32x128xf32, #tpu.memory_space<vmem>>, vector<32x128xf32>
    %cst = arith.constant dense<0.000000e+00> : vector<64x128xf32>
    %3 = tpu.matmul %1, %2, %cst {dimension_numbers = #tpu.dot_dimension_numbers<[1], [0], [0], [1], [0, 0, 1, 1], [], []>} : vector<64x32xf32>, vector<32x128xf32>, vector<64x128xf32> -> vector<64x128xf32>
    %c0_4 = arith.constant 0 : index
    %c0_5 = arith.constant 0 : index
    %4 = vector.load %arg5[%c0_4, %c0_5] : memref<1x128xf32, #tpu.memory_space<vmem>>, vector<1x128xf32>
    %5 = vector.broadcast %4 : vector<1x128xf32> to vector<64x128xf32>
    %6 = arith.addf %3, %5 : vector<64x128xf32>
    %c0_6 = arith.constant 0 : index
    %c0_7 = arith.constant 0 : index
    %7 = vector.load %arg16[%c0_6, %c0_7] : memref<64x128xf32, #tpu.memory_space<vmem>>, vector<64x128xf32>
    tpu.vector_store %arg16[%c0_6, %c0_7], %6 {strides = array<i32>} : memref<64x128xf32, #tpu.memory_space<vmem>>, vector<64x128xf32>,
    %c0_8 = arith.constant 0 : index
    %c0_9 = arith.constant 0 : index
    %8 = vector.load %arg4[%c0_8, %c0_9] : memref<32x128xf32, #tpu.memory_space<vmem>>, vector<32x128xf32>
    %cst_10 = arith.constant dense<0.000000e+00> : vector<64x128xf32>
    %9 = tpu.matmul %1, %8, %cst_10 {dimension_numbers = #tpu.dot_dimension_numbers<[1], [0], [0], [1], [0, 0, 1, 1], [], []>} : vector<64x32xf32>, vector<32x128xf32>, vector<64x128xf32> -> vector<64x128xf32>
    %c0_11 = arith.constant 0 : index
    %c0_12 = arith.constant 0 : index
    %10 = vector.load %arg6[%c0_11, %c0_12] : memref<1x128xf32, #tpu.memory_space<vmem>>, vector<1x128xf32>
    %11 = vector.broadcast %10 : vector<1x128xf32> to vector<64x128xf32>
    %12 = arith.addf %9, %11 : vector<64x128xf32>
    %c0_13 = arith.constant 0 : index
    %c0_14 = arith.constant 0 : index
    %13 = vector.load %arg17[%c0_13, %c0_14] : memref<64x128xf32, #tpu.memory_space<vmem>>, vector<64x128xf32>
    tpu.vector_store %arg17[%c0_13, %c0_14], %12 {strides = array<i32>} : memref<64x128xf32, #tpu.memory_space<vmem>>, vector<64x128xf32>,
    %c0_15 = arith.constant 0 : index
    %c0_16 = arith.constant 0 : index
    %14 = vector.load %arg7[%c0_15, %c0_16] : memref<32x128xf32, #tpu.memory_space<vmem>>, vector<32x128xf32>
    %cst_17 = arith.constant 0.000000e+00 : f32
    %15 = vector.broadcast %cst_17 : f32 to vector<8x32xf32>
    %cst_18 = arith.constant 0.000000e+00 : f32
    %16 = vector.broadcast %cst_18 : f32 to vector<8x32xf32>
    %c0_i32 = arith.constant 0 : i32
    %c7_i32 = arith.constant 7 : i32
    %17 = arith.subi %c7_i32, %c0_i32 : i32
    %c8_i32 = arith.constant 8 : i32
    %18 = arith.muli %c0_i32, %c8_i32 : i32
    %19 = tpu.assume_multiple %18, 8 : i32
    %c8_i32_19 = arith.constant 8 : i32
    %20 = arith.muli %17, %c8_i32_19 : i32
    %21 = tpu.assume_multiple %20, 8 : i32
    %22 = arith.index_cast %19 : i32 to index
    %c0_20 = arith.constant 0 : index
    %23 = vector.load %arg16[%22, %c0_20] : memref<64x128xf32, #tpu.memory_space<vmem>>, vector<8x128xf32>
    %24 = arith.index_cast %21 : i32 to index
    %c0_21 = arith.constant 0 : index
    %25 = vector.load %arg17[%24, %c0_21] : memref<64x128xf32, #tpu.memory_space<vmem>>, vector<8x128xf32>
    %26 = arith.addf %23, %25 : vector<8x128xf32>
    %cst_22 = arith.constant dense<0.000000e+00> : vector<8x128xf32>
    %27 = tpu.matmul %15, %14, %cst_22 {dimension_numbers = #tpu.dot_dimension_numbers<[1], [0], [0], [1], [0, 0, 1, 1], [], []>} : vector<8x32xf32>, vector<32x128xf32>, vector<8x128xf32> -> vector<8x128xf32>
    %28 = arith.addf %26, %27 : vector<8x128xf32>
    %29 = vector.extract_strided_slice %28 {offsets = [0, 0], sizes = [8, 32], strides = [1, 1]} : vector<8x128xf32> to vector<8x32xf32>
    %30 = arith.negf %29 : vector<8x32xf32>
    %31 = math.exp %30 : vector<8x32xf32>
    %cst_23 = arith.constant 1.000000e+00 : f32
    %32 = vector.broadcast %cst_23 : f32 to vector<8x32xf32>
    %33 = arith.addf %32, %31 : vector<8x32xf32>
    %34 = arith.divf %32, %33 : vector<8x32xf32>
    %35 = vector.extract_strided_slice %28 {offsets = [0, 32], sizes = [8, 32], strides = [1, 1]} : vector<8x128xf32> to vector<8x32xf32>
    %36 = arith.negf %35 : vector<8x32xf32>
    %37 = math.exp %36 : vector<8x32xf32>
    %cst_24 = arith.constant 1.000000e+00 : f32
    %38 = vector.broadcast %cst_24 : f32 to vector<8x32xf32>
    %39 = arith.addf %38, %37 : vector<8x32xf32>
    %40 = arith.divf %38, %39 : vector<8x32xf32>
    %41 = vector.extract_strided_slice %28 {offsets = [0, 64], sizes = [8, 32], strides = [1, 1]} : vector<8x128xf32> to vector<8x32xf32>
    %42 = math.tanh %41 : vector<8x32xf32>
    %43 = vector.extract_strided_slice %28 {offsets = [0, 96], sizes = [8, 32], strides = [1, 1]} : vector<8x128xf32> to vector<8x32xf32>
    %44 = arith.negf %43 : vector<8x32xf32>
    %45 = math.exp %44 : vector<8x32xf32>
    %cst_25 = arith.constant 1.000000e+00 : f32
    %46 = vector.broadcast %cst_25 : f32 to vector<8x32xf32>
    %47 = arith.addf %46, %45 : vector<8x32xf32>
    %48 = arith.divf %46, %47 : vector<8x32xf32>
    %49 = arith.mulf %40, %16 : vector<8x32xf32>
    %50 = arith.mulf %34, %42 : vector<8x32xf32>
    %51 = arith.addf %49, %50 : vector<8x32xf32>
    %52 = math.tanh %51 : vector<8x32xf32>
    %53 = arith.mulf %48, %52 : vector<8x32xf32>
    %54 = vector.extract_strided_slice %53 {offsets = [0, 0], sizes = [8, 16], strides = [1, 1]} : vector<8x32xf32> to vector<8x16xf32>
    %55 = arith.index_cast %19 : i32 to index
    %c0_26 = arith.constant 0 : index
    %56 = vector.load %arg18[%55, %c0_26] : memref<64x32xf32, #tpu.memory_space<vmem>>, vector<8x16xf32>
    tpu.vector_store %arg18[%55, %c0_26], %54 {strides = array<i32>} : memref<64x32xf32, #tpu.memory_space<vmem>>, vector<8x16xf32>,
    %57 = vector.extract_strided_slice %53 {offsets = [0, 16], sizes = [8, 16], strides = [1, 1]} : vector<8x32xf32> to vector<8x16xf32>
    %58 = arith.index_cast %21 : i32 to index
    %c16 = arith.constant 16 : index
    %59 = vector.load %arg18[%58, %c16] : memref<64x32xf32, #tpu.memory_space<vmem>>, vector<8x16xf32>
    tpu.vector_store %arg18[%58, %c16], %57 {strides = array<i32>} : memref<64x32xf32, #tpu.memory_space<vmem>>, vector<8x16xf32>,
    %c1_i32 = arith.constant 1 : i32
    %c7_i32_27 = arith.constant 7 : i32
    %60 = arith.subi %c7_i32_27, %c1_i32 : i32
    %c8_i32_28 = arith.constant 8 : i32
    %61 = arith.muli %c1_i32, %c8_i32_28 : i32
    %62 = tpu.assume_multiple %61, 8 : i32
    %c8_i32_29 = arith.constant 8 : i32
    %63 = arith.muli %60, %c8_i32_29 : i32
    %64 = tpu.assume_multiple %63, 8 : i32
    %65 = arith.index_cast %62 : i32 to index
    %c0_30 = arith.constant 0 : index
    %66 = vector.load %arg16[%65, %c0_30] : memref<64x128xf32, #tpu.memory_space<vmem>>, vector<8x128xf32>
    %67 = arith.index_cast %64 : i32 to index
    %c0_31 = arith.constant 0 : index
    %68 = vector.load %arg17[%67, %c0_31] : memref<64x128xf32, #tpu.memory_space<vmem>>, vector<8x128xf32>
    %69 = arith.addf %66, %68 : vector<8x128xf32>
    %cst_32 = arith.constant dense<0.000000e+00> : vector<8x128xf32>
    %70 = tpu.matmul %53, %14, %cst_32 {dimension_numbers = #tpu.dot_dimension_numbers<[1], [0], [0], [1], [0, 0, 1, 1], [], []>} : vector<8x32xf32>, vector<32x128xf32>, vector<8x128xf32> -> vector<8x128xf32>
    %71 = arith.addf %69, %70 : vector<8x128xf32>
    %72 = vector.extract_strided_slice %71 {offsets = [0, 0], sizes = [8, 32], strides = [1, 1]} : vector<8x128xf32> to vector<8x32xf32>
    %73 = arith.negf %72 : vector<8x32xf32>
    %74 = math.exp %73 : vector<8x32xf32>
    %cst_33 = arith.constant 1.000000e+00 : f32
    %75 = vector.broadcast %cst_33 : f32 to vector<8x32xf32>
    %76 = arith.addf %75, %74 : vector<8x32xf32>
    %77 = arith.divf %75, %76 : vector<8x32xf32>
    %78 = vector.extract_strided_slice %71 {offsets = [0, 32], sizes = [8, 32], strides = [1, 1]} : vector<8x128xf32> to vector<8x32xf32>
    %79 = arith.negf %78 : vector<8x32xf32>
    %80 = math.exp %79 : vector<8x32xf32>
    %cst_34 = arith.constant 1.000000e+00 : f32
    %81 = vector.broadcast %cst_34 : f32 to vector<8x32xf32>
    %82 = arith.addf %81, %80 : vector<8x32xf32>
    %83 = arith.divf %81, %82 : vector<8x32xf32>
    %84 = vector.extract_strided_slice %71 {offsets = [0, 64], sizes = [8, 32], strides = [1, 1]} : vector<8x128xf32> to vector<8x32xf32>
    %85 = math.tanh %84 : vector<8x32xf32>
    %86 = vector.extract_strided_slice %71 {offsets = [0, 96], sizes = [8, 32], strides = [1, 1]} : vector<8x128xf32> to vector<8x32xf32>
    %87 = arith.negf %86 : vector<8x32xf32>
    %88 = math.exp %87 : vector<8x32xf32>
    %cst_35 = arith.constant 1.000000e+00 : f32
    %89 = vector.broadcast %cst_35 : f32 to vector<8x32xf32>
    %90 = arith.addf %89, %88 : vector<8x32xf32>
    %91 = arith.divf %89, %90 : vector<8x32xf32>
    %92 = arith.mulf %83, %51 : vector<8x32xf32>
    %93 = arith.mulf %77, %85 : vector<8x32xf32>
    %94 = arith.addf %92, %93 : vector<8x32xf32>
    %95 = math.tanh %94 : vector<8x32xf32>
    %96 = arith.mulf %91, %95 : vector<8x32xf32>
    %97 = vector.extract_strided_slice %96 {offsets = [0, 0], sizes = [8, 16], strides = [1, 1]} : vector<8x32xf32> to vector<8x16xf32>
    %98 = arith.index_cast %62 : i32 to index
    %c0_36 = arith.constant 0 : index
    %99 = vector.load %arg18[%98, %c0_36] : memref<64x32xf32, #tpu.memory_space<vmem>>, vector<8x16xf32>
    tpu.vector_store %arg18[%98, %c0_36], %97 {strides = array<i32>} : memref<64x32xf32, #tpu.memory_space<vmem>>, vector<8x16xf32>,
    %100 = vector.extract_strided_slice %96 {offsets = [0, 16], sizes = [8, 16], strides = [1, 1]} : vector<8x32xf32> to vector<8x16xf32>
    %101 = arith.index_cast %64 : i32 to index
    %c16_37 = arith.constant 16 : index
    %102 = vector.load %arg18[%101, %c16_37] : memref<64x32xf32, #tpu.memory_space<vmem>>, vector<8x16xf32>
    tpu.vector_store %arg18[%101, %c16_37], %100 {strides = array<i32>} : memref<64x32xf32, #tpu.memory_space<vmem>>, vector<8x16xf32>,
    %c2_i32 = arith.constant 2 : i32
    %c7_i32_38 = arith.constant 7 : i32
    %103 = arith.subi %c7_i32_38, %c2_i32 : i32
    %c8_i32_39 = arith.constant 8 : i32
    %104 = arith.muli %c2_i32, %c8_i32_39 : i32
    %105 = tpu.assume_multiple %104, 8 : i32
    %c8_i32_40 = arith.constant 8 : i32
    %106 = arith.muli %103, %c8_i32_40 : i32
    %107 = tpu.assume_multiple %106, 8 : i32
    %108 = arith.index_cast %105 : i32 to index
    %c0_41 = arith.constant 0 : index
    %109 = vector.load %arg16[%108, %c0_41] : memref<64x128xf32, #tpu.memory_space<vmem>>, vector<8x128xf32>
    %110 = arith.index_cast %107 : i32 to index
    %c0_42 = arith.constant 0 : index
    %111 = vector.load %arg17[%110, %c0_42] : memref<64x128xf32, #tpu.memory_space<vmem>>, vector<8x128xf32>
    %112 = arith.addf %109, %111 : vector<8x128xf32>
    %cst_43 = arith.constant dense<0.000000e+00> : vector<8x128xf32>
    %113 = tpu.matmul %96, %14, %cst_43 {dimension_numbers = #tpu.dot_dimension_numbers<[1], [0], [0], [1], [0, 0, 1, 1], [], []>} : vector<8x32xf32>, vector<32x128xf32>, vector<8x128xf32> -> vector<8x128xf32>
    %114 = arith.addf %112, %113 : vector<8x128xf32>
    %115 = vector.extract_strided_slice %114 {offsets = [0, 0], sizes = [8, 32], strides = [1, 1]} : vector<8x128xf32> to vector<8x32xf32>
    %116 = arith.negf %115 : vector<8x32xf32>
    %117 = math.exp %116 : vector<8x32xf32>
    %cst_44 = arith.constant 1.000000e+00 : f32
    %118 = vector.broadcast %cst_44 : f32 to vector<8x32xf32>
    %119 = arith.addf %118, %117 : vector<8x32xf32>
    %120 = arith.divf %118, %119 : vector<8x32xf32>
    %121 = vector.extract_strided_slice %114 {offsets = [0, 32], sizes = [8, 32], strides = [1, 1]} : vector<8x128xf32> to vector<8x32xf32>
    %122 = arith.negf %121 : vector<8x32xf32>
    %123 = math.exp %122 : vector<8x32xf32>
    %cst_45 = arith.constant 1.000000e+00 : f32
    %124 = vector.broadcast %cst_45 : f32 to vector<8x32xf32>
    %125 = arith.addf %124, %123 : vector<8x32xf32>
    %126 = arith.divf %124, %125 : vector<8x32xf32>
    %127 = vector.extract_strided_slice %114 {offsets = [0, 64], sizes = [8, 32], strides = [1, 1]} : vector<8x128xf32> to vector<8x32xf32>
    %128 = math.tanh %127 : vector<8x32xf32>
    %129 = vector.extract_strided_slice %114 {offsets = [0, 96], sizes = [8, 32], strides = [1, 1]} : vector<8x128xf32> to vector<8x32xf32>
    %130 = arith.negf %129 : vector<8x32xf32>
    %131 = math.exp %130 : vector<8x32xf32>
    %cst_46 = arith.constant 1.000000e+00 : f32
    %132 = vector.broadcast %cst_46 : f32 to vector<8x32xf32>
    %133 = arith.addf %132, %131 : vector<8x32xf32>
    %134 = arith.divf %132, %133 : vector<8x32xf32>
    %135 = arith.mulf %126, %94 : vector<8x32xf32>
    %136 = arith.mulf %120, %128 : vector<8x32xf32>
    %137 = arith.addf %135, %136 : vector<8x32xf32>
    %138 = math.tanh %137 : vector<8x32xf32>
    %139 = arith.mulf %134, %138 : vector<8x32xf32>
    %140 = vector.extract_strided_slice %139 {offsets = [0, 0], sizes = [8, 16], strides = [1, 1]} : vector<8x32xf32> to vector<8x16xf32>
    %141 = arith.index_cast %105 : i32 to index
    %c0_47 = arith.constant 0 : index
    %142 = vector.load %arg18[%141, %c0_47] : memref<64x32xf32, #tpu.memory_space<vmem>>, vector<8x16xf32>
    tpu.vector_store %arg18[%141, %c0_47], %140 {strides = array<i32>} : memref<64x32xf32, #tpu.memory_space<vmem>>, vector<8x16xf32>,
    %143 = vector.extract_strided_slice %139 {offsets = [0, 16], sizes = [8, 16], strides = [1, 1]} : vector<8x32xf32> to vector<8x16xf32>
    %144 = arith.index_cast %107 : i32 to index
    %c16_48 = arith.constant 16 : index
    %145 = vector.load %arg18[%144, %c16_48] : memref<64x32xf32, #tpu.memory_space<vmem>>, vector<8x16xf32>
    tpu.vector_store %arg18[%144, %c16_48], %143 {strides = array<i32>} : memref<64x32xf32, #tpu.memory_space<vmem>>, vector<8x16xf32>,
    %c3_i32 = arith.constant 3 : i32
    %c7_i32_49 = arith.constant 7 : i32
    %146 = arith.subi %c7_i32_49, %c3_i32 : i32
    %c8_i32_50 = arith.constant 8 : i32
    %147 = arith.muli %c3_i32, %c8_i32_50 : i32
    %148 = tpu.assume_multiple %147, 8 : i32
    %c8_i32_51 = arith.constant 8 : i32
    %149 = arith.muli %146, %c8_i32_51 : i32
    %150 = tpu.assume_multiple %149, 8 : i32
    %151 = arith.index_cast %148 : i32 to index
    %c0_52 = arith.constant 0 : index
    %152 = vector.load %arg16[%151, %c0_52] : memref<64x128xf32, #tpu.memory_space<vmem>>, vector<8x128xf32>
    %153 = arith.index_cast %150 : i32 to index
    %c0_53 = arith.constant 0 : index
    %154 = vector.load %arg17[%153, %c0_53] : memref<64x128xf32, #tpu.memory_space<vmem>>, vector<8x128xf32>
    %155 = arith.addf %152, %154 : vector<8x128xf32>
    %cst_54 = arith.constant dense<0.000000e+00> : vector<8x128xf32>
    %156 = tpu.matmul %139, %14, %cst_54 {dimension_numbers = #tpu.dot_dimension_numbers<[1], [0], [0], [1], [0, 0, 1, 1], [], []>} : vector<8x32xf32>, vector<32x128xf32>, vector<8x128xf32> -> vector<8x128xf32>
    %157 = arith.addf %155, %156 : vector<8x128xf32>
    %158 = vector.extract_strided_slice %157 {offsets = [0, 0], sizes = [8, 32], strides = [1, 1]} : vector<8x128xf32> to vector<8x32xf32>
    %159 = arith.negf %158 : vector<8x32xf32>
    %160 = math.exp %159 : vector<8x32xf32>
    %cst_55 = arith.constant 1.000000e+00 : f32
    %161 = vector.broadcast %cst_55 : f32 to vector<8x32xf32>
    %162 = arith.addf %161, %160 : vector<8x32xf32>
    %163 = arith.divf %161, %162 : vector<8x32xf32>
    %164 = vector.extract_strided_slice %157 {offsets = [0, 32], sizes = [8, 32], strides = [1, 1]} : vector<8x128xf32> to vector<8x32xf32>
    %165 = arith.negf %164 : vector<8x32xf32>
    %166 = math.exp %165 : vector<8x32xf32>
    %cst_56 = arith.constant 1.000000e+00 : f32
    %167 = vector.broadcast %cst_56 : f32 to vector<8x32xf32>
    %168 = arith.addf %167, %166 : vector<8x32xf32>
    %169 = arith.divf %167, %168 : vector<8x32xf32>
    %170 = vector.extract_strided_slice %157 {offsets = [0, 64], sizes = [8, 32], strides = [1, 1]} : vector<8x128xf32> to vector<8x32xf32>
    %171 = math.tanh %170 : vector<8x32xf32>
    %172 = vector.extract_strided_slice %157 {offsets = [0, 96], sizes = [8, 32], strides = [1, 1]} : vector<8x128xf32> to vector<8x32xf32>
    %173 = arith.negf %172 : vector<8x32xf32>
    %174 = math.exp %173 : vector<8x32xf32>
    %cst_57 = arith.constant 1.000000e+00 : f32
    %175 = vector.broadcast %cst_57 : f32 to vector<8x32xf32>
    %176 = arith.addf %175, %174 : vector<8x32xf32>
    %177 = arith.divf %175, %176 : vector<8x32xf32>
    %178 = arith.mulf %169, %137 : vector<8x32xf32>
    %179 = arith.mulf %163, %171 : vector<8x32xf32>
    %180 = arith.addf %178, %179 : vector<8x32xf32>
    %181 = math.tanh %180 : vector<8x32xf32>
    %182 = arith.mulf %177, %181 : vector<8x32xf32>
    %183 = vector.extract_strided_slice %182 {offsets = [0, 0], sizes = [8, 16], strides = [1, 1]} : vector<8x32xf32> to vector<8x16xf32>
    %184 = arith.index_cast %148 : i32 to index
    %c0_58 = arith.constant 0 : index
    %185 = vector.load %arg18[%184, %c0_58] : memref<64x32xf32, #tpu.memory_space<vmem>>, vector<8x16xf32>
    tpu.vector_store %arg18[%184, %c0_58], %183 {strides = array<i32>} : memref<64x32xf32, #tpu.memory_space<vmem>>, vector<8x16xf32>,
    %186 = vector.extract_strided_slice %182 {offsets = [0, 16], sizes = [8, 16], strides = [1, 1]} : vector<8x32xf32> to vector<8x16xf32>
    %187 = arith.index_cast %150 : i32 to index
    %c16_59 = arith.constant 16 : index
    %188 = vector.load %arg18[%187, %c16_59] : memref<64x32xf32, #tpu.memory_space<vmem>>, vector<8x16xf32>
    tpu.vector_store %arg18[%187, %c16_59], %186 {strides = array<i32>} : memref<64x32xf32, #tpu.memory_space<vmem>>, vector<8x16xf32>,
    %c4_i32 = arith.constant 4 : i32
    %c7_i32_60 = arith.constant 7 : i32
    %189 = arith.subi %c7_i32_60, %c4_i32 : i32
    %c8_i32_61 = arith.constant 8 : i32
    %190 = arith.muli %c4_i32, %c8_i32_61 : i32
    %191 = tpu.assume_multiple %190, 8 : i32
    %c8_i32_62 = arith.constant 8 : i32
    %192 = arith.muli %189, %c8_i32_62 : i32
    %193 = tpu.assume_multiple %192, 8 : i32
    %194 = arith.index_cast %191 : i32 to index
    %c0_63 = arith.constant 0 : index
    %195 = vector.load %arg16[%194, %c0_63] : memref<64x128xf32, #tpu.memory_space<vmem>>, vector<8x128xf32>
    %196 = arith.index_cast %193 : i32 to index
    %c0_64 = arith.constant 0 : index
    %197 = vector.load %arg17[%196, %c0_64] : memref<64x128xf32, #tpu.memory_space<vmem>>, vector<8x128xf32>
    %198 = arith.addf %195, %197 : vector<8x128xf32>
    %cst_65 = arith.constant dense<0.000000e+00> : vector<8x128xf32>
    %199 = tpu.matmul %182, %14, %cst_65 {dimension_numbers = #tpu.dot_dimension_numbers<[1], [0], [0], [1], [0, 0, 1, 1], [], []>} : vector<8x32xf32>, vector<32x128xf32>, vector<8x128xf32> -> vector<8x128xf32>
    %200 = arith.addf %198, %199 : vector<8x128xf32>
    %201 = vector.extract_strided_slice %200 {offsets = [0, 0], sizes = [8, 32], strides = [1, 1]} : vector<8x128xf32> to vector<8x32xf32>
    %202 = arith.negf %201 : vector<8x32xf32>
    %203 = math.exp %202 : vector<8x32xf32>
    %cst_66 = arith.constant 1.000000e+00 : f32
    %204 = vector.broadcast %cst_66 : f32 to vector<8x32xf32>
    %205 = arith.addf %204, %203 : vector<8x32xf32>
    %206 = arith.divf %204, %205 : vector<8x32xf32>
    %207 = vector.extract_strided_slice %200 {offsets = [0, 32], sizes = [8, 32], strides = [1, 1]} : vector<8x128xf32> to vector<8x32xf32>
    %208 = arith.negf %207 : vector<8x32xf32>
    %209 = math.exp %208 : vector<8x32xf32>
    %cst_67 = arith.constant 1.000000e+00 : f32
    %210 = vector.broadcast %cst_67 : f32 to vector<8x32xf32>
    %211 = arith.addf %210, %209 : vector<8x32xf32>
    %212 = arith.divf %210, %211 : vector<8x32xf32>
    %213 = vector.extract_strided_slice %200 {offsets = [0, 64], sizes = [8, 32], strides = [1, 1]} : vector<8x128xf32> to vector<8x32xf32>
    %214 = math.tanh %213 : vector<8x32xf32>
    %215 = vector.extract_strided_slice %200 {offsets = [0, 96], sizes = [8, 32], strides = [1, 1]} : vector<8x128xf32> to vector<8x32xf32>
    %216 = arith.negf %215 : vector<8x32xf32>
    %217 = math.exp %216 : vector<8x32xf32>
    %cst_68 = arith.constant 1.000000e+00 : f32
    %218 = vector.broadcast %cst_68 : f32 to vector<8x32xf32>
    %219 = arith.addf %218, %217 : vector<8x32xf32>
    %220 = arith.divf %218, %219 : vector<8x32xf32>
    %221 = arith.mulf %212, %180 : vector<8x32xf32>
    %222 = arith.mulf %206, %214 : vector<8x32xf32>
    %223 = arith.addf %221, %222 : vector<8x32xf32>
    %224 = math.tanh %223 : vector<8x32xf32>
    %225 = arith.mulf %220, %224 : vector<8x32xf32>
    %226 = vector.extract_strided_slice %225 {offsets = [0, 0], sizes = [8, 16], strides = [1, 1]} : vector<8x32xf32> to vector<8x16xf32>
    %227 = arith.index_cast %191 : i32 to index
    %c0_69 = arith.constant 0 : index
    %228 = vector.load %arg18[%227, %c0_69] : memref<64x32xf32, #tpu.memory_space<vmem>>, vector<8x16xf32>
    tpu.vector_store %arg18[%227, %c0_69], %226 {strides = array<i32>} : memref<64x32xf32, #tpu.memory_space<vmem>>, vector<8x16xf32>,
    %229 = vector.extract_strided_slice %225 {offsets = [0, 16], sizes = [8, 16], strides = [1, 1]} : vector<8x32xf32> to vector<8x16xf32>
    %230 = arith.index_cast %193 : i32 to index
    %c16_70 = arith.constant 16 : index
    %231 = vector.load %arg18[%230, %c16_70] : memref<64x32xf32, #tpu.memory_space<vmem>>, vector<8x16xf32>
    tpu.vector_store %arg18[%230, %c16_70], %229 {strides = array<i32>} : memref<64x32xf32, #tpu.memory_space<vmem>>, vector<8x16xf32>,
    %c5_i32 = arith.constant 5 : i32
    %c7_i32_71 = arith.constant 7 : i32
    %232 = arith.subi %c7_i32_71, %c5_i32 : i32
    %c8_i32_72 = arith.constant 8 : i32
    %233 = arith.muli %c5_i32, %c8_i32_72 : i32
    %234 = tpu.assume_multiple %233, 8 : i32
    %c8_i32_73 = arith.constant 8 : i32
    %235 = arith.muli %232, %c8_i32_73 : i32
    %236 = tpu.assume_multiple %235, 8 : i32
    %237 = arith.index_cast %234 : i32 to index
    %c0_74 = arith.constant 0 : index
    %238 = vector.load %arg16[%237, %c0_74] : memref<64x128xf32, #tpu.memory_space<vmem>>, vector<8x128xf32>
    %239 = arith.index_cast %236 : i32 to index
    %c0_75 = arith.constant 0 : index
    %240 = vector.load %arg17[%239, %c0_75] : memref<64x128xf32, #tpu.memory_space<vmem>>, vector<8x128xf32>
    %241 = arith.addf %238, %240 : vector<8x128xf32>
    %cst_76 = arith.constant dense<0.000000e+00> : vector<8x128xf32>
    %242 = tpu.matmul %225, %14, %cst_76 {dimension_numbers = #tpu.dot_dimension_numbers<[1], [0], [0], [1], [0, 0, 1, 1], [], []>} : vector<8x32xf32>, vector<32x128xf32>, vector<8x128xf32> -> vector<8x128xf32>
    %243 = arith.addf %241, %242 : vector<8x128xf32>
    %244 = vector.extract_strided_slice %243 {offsets = [0, 0], sizes = [8, 32], strides = [1, 1]} : vector<8x128xf32> to vector<8x32xf32>
    %245 = arith.negf %244 : vector<8x32xf32>
    %246 = math.exp %245 : vector<8x32xf32>
    %cst_77 = arith.constant 1.000000e+00 : f32
    %247 = vector.broadcast %cst_77 : f32 to vector<8x32xf32>
    %248 = arith.addf %247, %246 : vector<8x32xf32>
    %249 = arith.divf %247, %248 : vector<8x32xf32>
    %250 = vector.extract_strided_slice %243 {offsets = [0, 32], sizes = [8, 32], strides = [1, 1]} : vector<8x128xf32> to vector<8x32xf32>
    %251 = arith.negf %250 : vector<8x32xf32>
    %252 = math.exp %251 : vector<8x32xf32>
    %cst_78 = arith.constant 1.000000e+00 : f32
    %253 = vector.broadcast %cst_78 : f32 to vector<8x32xf32>
    %254 = arith.addf %253, %252 : vector<8x32xf32>
    %255 = arith.divf %253, %254 : vector<8x32xf32>
    %256 = vector.extract_strided_slice %243 {offsets = [0, 64], sizes = [8, 32], strides = [1, 1]} : vector<8x128xf32> to vector<8x32xf32>
    %257 = math.tanh %256 : vector<8x32xf32>
    %258 = vector.extract_strided_slice %243 {offsets = [0, 96], sizes = [8, 32], strides = [1, 1]} : vector<8x128xf32> to vector<8x32xf32>
    %259 = arith.negf %258 : vector<8x32xf32>
    %260 = math.exp %259 : vector<8x32xf32>
    %cst_79 = arith.constant 1.000000e+00 : f32
    %261 = vector.broadcast %cst_79 : f32 to vector<8x32xf32>
    %262 = arith.addf %261, %260 : vector<8x32xf32>
    %263 = arith.divf %261, %262 : vector<8x32xf32>
    %264 = arith.mulf %255, %223 : vector<8x32xf32>
    %265 = arith.mulf %249, %257 : vector<8x32xf32>
    %266 = arith.addf %264, %265 : vector<8x32xf32>
    %267 = math.tanh %266 : vector<8x32xf32>
    %268 = arith.mulf %263, %267 : vector<8x32xf32>
    %269 = vector.extract_strided_slice %268 {offsets = [0, 0], sizes = [8, 16], strides = [1, 1]} : vector<8x32xf32> to vector<8x16xf32>
    %270 = arith.index_cast %234 : i32 to index
    %c0_80 = arith.constant 0 : index
    %271 = vector.load %arg18[%270, %c0_80] : memref<64x32xf32, #tpu.memory_space<vmem>>, vector<8x16xf32>
    tpu.vector_store %arg18[%270, %c0_80], %269 {strides = array<i32>} : memref<64x32xf32, #tpu.memory_space<vmem>>, vector<8x16xf32>,
    %272 = vector.extract_strided_slice %268 {offsets = [0, 16], sizes = [8, 16], strides = [1, 1]} : vector<8x32xf32> to vector<8x16xf32>
    %273 = arith.index_cast %236 : i32 to index
    %c16_81 = arith.constant 16 : index
    %274 = vector.load %arg18[%273, %c16_81] : memref<64x32xf32, #tpu.memory_space<vmem>>, vector<8x16xf32>
    tpu.vector_store %arg18[%273, %c16_81], %272 {strides = array<i32>} : memref<64x32xf32, #tpu.memory_space<vmem>>, vector<8x16xf32>,
    %c6_i32 = arith.constant 6 : i32
    %c7_i32_82 = arith.constant 7 : i32
    %275 = arith.subi %c7_i32_82, %c6_i32 : i32
    %c8_i32_83 = arith.constant 8 : i32
    %276 = arith.muli %c6_i32, %c8_i32_83 : i32
    %277 = tpu.assume_multiple %276, 8 : i32
    %c8_i32_84 = arith.constant 8 : i32
    %278 = arith.muli %275, %c8_i32_84 : i32
    %279 = tpu.assume_multiple %278, 8 : i32
    %280 = arith.index_cast %277 : i32 to index
    %c0_85 = arith.constant 0 : index
    %281 = vector.load %arg16[%280, %c0_85] : memref<64x128xf32, #tpu.memory_space<vmem>>, vector<8x128xf32>
    %282 = arith.index_cast %279 : i32 to index
    %c0_86 = arith.constant 0 : index
    %283 = vector.load %arg17[%282, %c0_86] : memref<64x128xf32, #tpu.memory_space<vmem>>, vector<8x128xf32>
    %284 = arith.addf %281, %283 : vector<8x128xf32>
    %cst_87 = arith.constant dense<0.000000e+00> : vector<8x128xf32>
    %285 = tpu.matmul %268, %14, %cst_87 {dimension_numbers = #tpu.dot_dimension_numbers<[1], [0], [0], [1], [0, 0, 1, 1], [], []>} : vector<8x32xf32>, vector<32x128xf32>, vector<8x128xf32> -> vector<8x128xf32>
    %286 = arith.addf %284, %285 : vector<8x128xf32>
    %287 = vector.extract_strided_slice %286 {offsets = [0, 0], sizes = [8, 32], strides = [1, 1]} : vector<8x128xf32> to vector<8x32xf32>
    %288 = arith.negf %287 : vector<8x32xf32>
    %289 = math.exp %288 : vector<8x32xf32>
    %cst_88 = arith.constant 1.000000e+00 : f32
    %290 = vector.broadcast %cst_88 : f32 to vector<8x32xf32>
    %291 = arith.addf %290, %289 : vector<8x32xf32>
    %292 = arith.divf %290, %291 : vector<8x32xf32>
    %293 = vector.extract_strided_slice %286 {offsets = [0, 32], sizes = [8, 32], strides = [1, 1]} : vector<8x128xf32> to vector<8x32xf32>
    %294 = arith.negf %293 : vector<8x32xf32>
    %295 = math.exp %294 : vector<8x32xf32>
    %cst_89 = arith.constant 1.000000e+00 : f32
    %296 = vector.broadcast %cst_89 : f32 to vector<8x32xf32>
    %297 = arith.addf %296, %295 : vector<8x32xf32>
    %298 = arith.divf %296, %297 : vector<8x32xf32>
    %299 = vector.extract_strided_slice %286 {offsets = [0, 64], sizes = [8, 32], strides = [1, 1]} : vector<8x128xf32> to vector<8x32xf32>
    %300 = math.tanh %299 : vector<8x32xf32>
    %301 = vector.extract_strided_slice %286 {offsets = [0, 96], sizes = [8, 32], strides = [1, 1]} : vector<8x128xf32> to vector<8x32xf32>
    %302 = arith.negf %301 : vector<8x32xf32>
    %303 = math.exp %302 : vector<8x32xf32>
    %cst_90 = arith.constant 1.000000e+00 : f32
    %304 = vector.broadcast %cst_90 : f32 to vector<8x32xf32>
    %305 = arith.addf %304, %303 : vector<8x32xf32>
    %306 = arith.divf %304, %305 : vector<8x32xf32>
    %307 = arith.mulf %298, %266 : vector<8x32xf32>
    %308 = arith.mulf %292, %300 : vector<8x32xf32>
    %309 = arith.addf %307, %308 : vector<8x32xf32>
    %310 = math.tanh %309 : vector<8x32xf32>
    %311 = arith.mulf %306, %310 : vector<8x32xf32>
    %312 = vector.extract_strided_slice %311 {offsets = [0, 0], sizes = [8, 16], strides = [1, 1]} : vector<8x32xf32> to vector<8x16xf32>
    %313 = arith.index_cast %277 : i32 to index
    %c0_91 = arith.constant 0 : index
    %314 = vector.load %arg18[%313, %c0_91] : memref<64x32xf32, #tpu.memory_space<vmem>>, vector<8x16xf32>
    tpu.vector_store %arg18[%313, %c0_91], %312 {strides = array<i32>} : memref<64x32xf32, #tpu.memory_space<vmem>>, vector<8x16xf32>,
    %315 = vector.extract_strided_slice %311 {offsets = [0, 16], sizes = [8, 16], strides = [1, 1]} : vector<8x32xf32> to vector<8x16xf32>
    %316 = arith.index_cast %279 : i32 to index
    %c16_92 = arith.constant 16 : index
    %317 = vector.load %arg18[%316, %c16_92] : memref<64x32xf32, #tpu.memory_space<vmem>>, vector<8x16xf32>
    tpu.vector_store %arg18[%316, %c16_92], %315 {strides = array<i32>} : memref<64x32xf32, #tpu.memory_space<vmem>>, vector<8x16xf32>,
    %c7_i32_93 = arith.constant 7 : i32
    %c7_i32_94 = arith.constant 7 : i32
    %318 = arith.subi %c7_i32_94, %c7_i32_93 : i32
    %c8_i32_95 = arith.constant 8 : i32
    %319 = arith.muli %c7_i32_93, %c8_i32_95 : i32
    %320 = tpu.assume_multiple %319, 8 : i32
    %c8_i32_96 = arith.constant 8 : i32
    %321 = arith.muli %318, %c8_i32_96 : i32
    %322 = tpu.assume_multiple %321, 8 : i32
    %323 = arith.index_cast %320 : i32 to index
    %c0_97 = arith.constant 0 : index
    %324 = vector.load %arg16[%323, %c0_97] : memref<64x128xf32, #tpu.memory_space<vmem>>, vector<8x128xf32>
    %325 = arith.index_cast %322 : i32 to index
    %c0_98 = arith.constant 0 : index
    %326 = vector.load %arg17[%325, %c0_98] : memref<64x128xf32, #tpu.memory_space<vmem>>, vector<8x128xf32>
    %327 = arith.addf %324, %326 : vector<8x128xf32>
    %cst_99 = arith.constant dense<0.000000e+00> : vector<8x128xf32>
    %328 = tpu.matmul %311, %14, %cst_99 {dimension_numbers = #tpu.dot_dimension_numbers<[1], [0], [0], [1], [0, 0, 1, 1], [], []>} : vector<8x32xf32>, vector<32x128xf32>, vector<8x128xf32> -> vector<8x128xf32>
    %329 = arith.addf %327, %328 : vector<8x128xf32>
    %330 = vector.extract_strided_slice %329 {offsets = [0, 0], sizes = [8, 32], strides = [1, 1]} : vector<8x128xf32> to vector<8x32xf32>
    %331 = arith.negf %330 : vector<8x32xf32>
    %332 = math.exp %331 : vector<8x32xf32>
    %cst_100 = arith.constant 1.000000e+00 : f32
    %333 = vector.broadcast %cst_100 : f32 to vector<8x32xf32>
    %334 = arith.addf %333, %332 : vector<8x32xf32>
    %335 = arith.divf %333, %334 : vector<8x32xf32>
    %336 = vector.extract_strided_slice %329 {offsets = [0, 32], sizes = [8, 32], strides = [1, 1]} : vector<8x128xf32> to vector<8x32xf32>
    %337 = arith.negf %336 : vector<8x32xf32>
    %338 = math.exp %337 : vector<8x32xf32>
    %cst_101 = arith.constant 1.000000e+00 : f32
    %339 = vector.broadcast %cst_101 : f32 to vector<8x32xf32>
    %340 = arith.addf %339, %338 : vector<8x32xf32>
    %341 = arith.divf %339, %340 : vector<8x32xf32>
    %342 = vector.extract_strided_slice %329 {offsets = [0, 64], sizes = [8, 32], strides = [1, 1]} : vector<8x128xf32> to vector<8x32xf32>
    %343 = math.tanh %342 : vector<8x32xf32>
    %344 = vector.extract_strided_slice %329 {offsets = [0, 96], sizes = [8, 32], strides = [1, 1]} : vector<8x128xf32> to vector<8x32xf32>
    %345 = arith.negf %344 : vector<8x32xf32>
    %346 = math.exp %345 : vector<8x32xf32>
    %cst_102 = arith.constant 1.000000e+00 : f32
    %347 = vector.broadcast %cst_102 : f32 to vector<8x32xf32>
    %348 = arith.addf %347, %346 : vector<8x32xf32>
    %349 = arith.divf %347, %348 : vector<8x32xf32>
    %350 = arith.mulf %341, %309 : vector<8x32xf32>
    %351 = arith.mulf %335, %343 : vector<8x32xf32>
    %352 = arith.addf %350, %351 : vector<8x32xf32>
    %353 = math.tanh %352 : vector<8x32xf32>
    %354 = arith.mulf %349, %353 : vector<8x32xf32>
    %355 = vector.extract_strided_slice %354 {offsets = [0, 0], sizes = [8, 16], strides = [1, 1]} : vector<8x32xf32> to vector<8x16xf32>
    %356 = arith.index_cast %320 : i32 to index
    %c0_103 = arith.constant 0 : index
    %357 = vector.load %arg18[%356, %c0_103] : memref<64x32xf32, #tpu.memory_space<vmem>>, vector<8x16xf32>
    tpu.vector_store %arg18[%356, %c0_103], %355 {strides = array<i32>} : memref<64x32xf32, #tpu.memory_space<vmem>>, vector<8x16xf32>,
    %358 = vector.extract_strided_slice %354 {offsets = [0, 16], sizes = [8, 16], strides = [1, 1]} : vector<8x32xf32> to vector<8x16xf32>
    %359 = arith.index_cast %322 : i32 to index
    %c16_104 = arith.constant 16 : index
    %360 = vector.load %arg18[%359, %c16_104] : memref<64x32xf32, #tpu.memory_space<vmem>>, vector<8x16xf32>
    tpu.vector_store %arg18[%359, %c16_104], %358 {strides = array<i32>} : memref<64x32xf32, #tpu.memory_space<vmem>>, vector<8x16xf32>,
    %c8_i32_105 = arith.constant 8 : i32
    %c0_106 = arith.constant 0 : index
    %c0_107 = arith.constant 0 : index
    %361 = vector.load %arg18[%c0_106, %c0_107] : memref<64x32xf32, #tpu.memory_space<vmem>>, vector<64x32xf32>
    %cst_108 = arith.constant 0.000000e+00 : f32
    %362 = vector.broadcast %cst_108 : f32 to vector<64x32xf32>
    %363 = arith.maximumf %361, %362 : vector<64x32xf32>
    %364 = vector.broadcast %cst_108 : f32 to vector<64x32xf32>
    %365 = arith.subf %361, %364 : vector<64x32xf32>
    %366 = arith.cmpf one, %365, %365 : vector<64x32xf32>
    %367 = vector.broadcast %cst_108 : f32 to vector<64x32xf32>
    %368 = arith.addf %361, %367 : vector<64x32xf32>
    %369 = math.absf %365 : vector<64x32xf32>
    %cst_109 = arith.constant 0.000000e+00 : f32
    %370 = vector.broadcast %cst_109 : f32 to vector<64x32xf32>
    %371 = arith.subf %370, %369 : vector<64x32xf32>
    %372 = math.exp %371 : vector<64x32xf32>
    %373 = math.log1p %372 : vector<64x32xf32>
    %374 = arith.addf %363, %373 : vector<64x32xf32>
    %375 = arith.select %366, %368, %374 : vector<64x32xi1>, vector<64x32xf32>
    %376 = math.tanh %375 : vector<64x32xf32>
    %377 = arith.mulf %361, %376 : vector<64x32xf32>
    %378 = arith.negf %361 : vector<64x32xf32>
    %379 = math.exp %378 : vector<64x32xf32>
    %cst_110 = arith.constant 1.000000e+00 : f32
    %380 = vector.broadcast %cst_110 : f32 to vector<64x32xf32>
    %381 = arith.addf %380, %379 : vector<64x32xf32>
    %382 = arith.divf %380, %381 : vector<64x32xf32>
    %383 = arith.addf %377, %382 : vector<64x32xf32>
    %384 = math.tanh %361 : vector<64x32xf32>
    %385 = arith.addf %383, %384 : vector<64x32xf32>
    %cst_111 = arith.constant dense<0.000000e+00> : vector<64xf32>
    %386 = vector.multi_reduction <add>, %385, %cst_111 [1] : vector<64x32xf32> to vector<64xf32>
    %387 = vector.shape_cast %386 : vector<64xf32> to vector<64x1xf32>
    %cst_112 = arith.constant 3.200000e+01 : f32
    %388 = vector.broadcast %cst_112 : f32 to vector<64x1xf32>
    %389 = arith.divf %387, %388 : vector<64x1xf32>
    %390 = vector.broadcast %389 : vector<64x1xf32> to vector<64x32xf32>
    %391 = arith.subf %385, %390 : vector<64x32xf32>
    %392 = arith.mulf %391, %391 : vector<64x32xf32>
    %cst_113 = arith.constant dense<0.000000e+00> : vector<64xf32>
    %393 = vector.multi_reduction <add>, %392, %cst_113 [1] : vector<64x32xf32> to vector<64xf32>
    %394 = vector.shape_cast %393 : vector<64xf32> to vector<64x1xf32>
    %cst_114 = arith.constant 3.200000e+01 : f32
    %395 = vector.broadcast %cst_114 : f32 to vector<64x1xf32>
    %396 = arith.divf %394, %395 : vector<64x1xf32>
    %397 = vector.broadcast %389 : vector<64x1xf32> to vector<64x32xf32>
    %398 = arith.subf %385, %397 : vector<64x32xf32>
    %cst_115 = arith.constant 9.99999974E-6 : f32
    %399 = vector.broadcast %cst_115 : f32 to vector<64x1xf32>
    %400 = arith.addf %396, %399 : vector<64x1xf32>
    %401 = math.rsqrt %400 : vector<64x1xf32>
    %402 = vector.broadcast %401 : vector<64x1xf32> to vector<64x32xf32>
    %403 = arith.mulf %398, %402 : vector<64x32xf32>
    %c0_116 = arith.constant 0 : index
    %c0_117 = arith.constant 0 : index
    %404 = vector.load %arg8[%c0_116, %c0_117] : memref<1x32xf32, #tpu.memory_space<vmem>>, vector<1x32xf32>
    %405 = vector.broadcast %404 : vector<1x32xf32> to vector<64x32xf32>
    %406 = arith.mulf %403, %405 : vector<64x32xf32>
    %c0_118 = arith.constant 0 : index
    %c0_119 = arith.constant 0 : index
    %407 = vector.load %arg9[%c0_118, %c0_119] : memref<1x32xf32, #tpu.memory_space<vmem>>, vector<1x32xf32>
    %408 = vector.broadcast %407 : vector<1x32xf32> to vector<64x32xf32>
    %409 = arith.addf %406, %408 : vector<64x32xf32>
    %c0_120 = arith.constant 0 : index
    %c0_121 = arith.constant 0 : index
    %410 = vector.load %arg10[%c0_120, %c0_121] : memref<32x32xf32, #tpu.memory_space<vmem>>, vector<32x32xf32>
    %cst_122 = arith.constant dense<0.000000e+00> : vector<64x32xf32>
    %411 = tpu.matmul %409, %410, %cst_122 {dimension_numbers = #tpu.dot_dimension_numbers<[1], [0], [0], [1], [0, 0, 1, 1], [], []>} : vector<64x32xf32>, vector<32x32xf32>, vector<64x32xf32> -> vector<64x32xf32>
    %c0_123 = arith.constant 0 : index
    %c0_124 = arith.constant 0 : index
    %412 = vector.load %arg11[%c0_123, %c0_124] : memref<1x32xf32, #tpu.memory_space<vmem>>, vector<1x32xf32>
    %413 = vector.broadcast %412 : vector<1x32xf32> to vector<64x32xf32>
    %414 = arith.addf %411, %413 : vector<64x32xf32>
    %415 = math.tanh %414 : vector<64x32xf32>
    %416 = vector.shape_cast %409 : vector<64x32xf32> to vector<8x8x32xf32>
    %417 = vector.shape_cast %415 : vector<64x32xf32> to vector<8x8x32xf32>
    %c0_125 = arith.constant 0 : index
    %c0_126 = arith.constant 0 : index
    %418 = vector.load %arg12[%c0_125, %c0_126] : memref<1x32xf32, #tpu.memory_space<vmem>>, vector<1x32xf32>
    %419 = vector.shape_cast %418 : vector<1x32xf32> to vector<1x1x32xf32>
    %420 = vector.broadcast %419 : vector<1x1x32xf32> to vector<8x8x32xf32>
    %421 = arith.mulf %417, %420 : vector<8x8x32xf32>
    %cst_127 = arith.constant dense<0.000000e+00> : vector<8x8xf32>
    %422 = vector.multi_reduction <add>, %421, %cst_127 [2] : vector<8x8x32xf32> to vector<8x8xf32>
    %423 = vector.shape_cast %422 : vector<8x8xf32> to vector<8x8x1xf32>
    %c0_128 = arith.constant 0 : index
    %c0_129 = arith.constant 0 : index
    %424 = vector.load %arg13[%c0_128, %c0_129] : memref<1x1xf32, #tpu.memory_space<vmem>>, vector<1x1xf32>
    %425 = vector.shape_cast %424 : vector<1x1xf32> to vector<1x1x1xf32>
    %426 = vector.broadcast %425 : vector<1x1x1xf32> to vector<8x8x1xf32>
    %427 = arith.addf %423, %426 : vector<8x8x1xf32>
    %c0_130 = arith.constant 0 : index
    %c0_131 = arith.constant 0 : index
    %c0_132 = arith.constant 0 : index
    %c0_133 = arith.constant 0 : index
    %428 = vector.load %arg2[%c0_130, %c0_131, %c0_132, %c0_133] : memref<1x8x8x1xf32, #tpu.memory_space<vmem>>, vector<1x8x8x1xf32>
    %429 = vector.shape_cast %428 : vector<1x8x8x1xf32> to vector<8x8x1xf32>
    %cst_134 = arith.constant 0.000000e+00 : f32
    %430 = vector.broadcast %cst_134 : f32 to vector<8x8x1xf32>
    %431 = arith.cmpf ogt, %429, %430 : vector<8x8x1xf32>
    %cst_135 = arith.constant 0xFF800000 : f32
    %432 = vector.broadcast %cst_135 : f32 to vector<8x8x1xf32>
    %433 = arith.select %431, %427, %432 : vector<8x8x1xi1>, vector<8x8x1xf32>
    %cst_136 = arith.constant dense<0xFF800000> : vector<8x1xf32>
    %434 = vector.multi_reduction <maximumf>, %433, %cst_136 [0] : vector<8x8x1xf32> to vector<8x1xf32>
    %435 = vector.shape_cast %434 : vector<8x1xf32> to vector<1x8x1xf32>
    %436 = vector.broadcast %435 : vector<1x8x1xf32> to vector<8x8x1xf32>
    %437 = arith.subf %433, %436 : vector<8x8x1xf32>
    %438 = math.exp %437 : vector<8x8x1xf32>
    %cst_137 = arith.constant dense<0.000000e+00> : vector<8x1xf32>
    %439 = vector.multi_reduction <add>, %438, %cst_137 [0] : vector<8x8x1xf32> to vector<8x1xf32>
    %440 = vector.shape_cast %439 : vector<8x1xf32> to vector<1x8x1xf32>
    %441 = vector.broadcast %440 : vector<1x8x1xf32> to vector<8x8x1xf32>
    %442 = arith.divf %438, %441 : vector<8x8x1xf32>
    %c0_138 = arith.constant 0 : index
    %c0_139 = arith.constant 0 : index
    %c0_140 = arith.constant 0 : index
    %c0_141 = arith.constant 0 : index
    %443 = vector.load %arg15[%c0_138, %c0_139, %c0_140, %c0_141] : memref<1x8x8x1xf32, #tpu.memory_space<vmem>>, vector<1x8x8x1xf32>
    %444 = vector.shape_cast %443 : vector<1x8x8x1xf32> to vector<8x8x1xf32>
    %445 = vector.shape_cast %442 : vector<8x8x1xf32> to vector<1x8x8x1xf32>
    tpu.vector_store %arg15[%c0_138, %c0_139, %c0_140, %c0_141], %445 {strides = array<i32>} : memref<1x8x8x1xf32, #tpu.memory_space<vmem>>, vector<1x8x8x1xf32>,
    %446 = vector.broadcast %442 : vector<8x8x1xf32> to vector<8x8x32xf32>
    %447 = arith.mulf %416, %446 : vector<8x8x32xf32>
    %cst_142 = arith.constant dense<0.000000e+00> : vector<8x32xf32>
    %448 = vector.multi_reduction <add>, %447, %cst_142 [0] : vector<8x8x32xf32> to vector<8x32xf32>
    %c0_143 = arith.constant 0 : index
    %c0_144 = arith.constant 0 : index
    %c0_145 = arith.constant 0 : index
    %449 = vector.load %arg14[%c0_143, %c0_144, %c0_145] : memref<1x8x32xf32, #tpu.memory_space<vmem>>, vector<1x8x32xf32>
    %450 = vector.shape_cast %449 : vector<1x8x32xf32> to vector<8x32xf32>
    %451 = vector.shape_cast %448 : vector<8x32xf32> to vector<1x8x32xf32>
    tpu.vector_store %arg14[%c0_143, %c0_144, %c0_145], %451 {strides = array<i32>} : memref<1x8x32xf32, #tpu.memory_space<vmem>>, vector<1x8x32xf32>,
    return
  }
  func.func @transform_0(%arg0: i32) -> (i32, i32, i32) {
    %c0_i32 = arith.constant 0 : i32
    %c0_i32_0 = arith.constant 0 : i32
    %c0_i32_1 = arith.constant 0 : i32
    return %arg0, %c0_i32, %c0_i32_0 : i32, i32, i32
  }
  func.func @transform_1(%arg0: i32) -> (i32, i32, i32, i32) {
    %c0_i32 = arith.constant 0 : i32
    %c0_i32_0 = arith.constant 0 : i32
    %c0_i32_1 = arith.constant 0 : i32
    %c0_i32_2 = arith.constant 0 : i32
    return %arg0, %c0_i32, %c0_i32_0, %c0_i32_1 : i32, i32, i32, i32
  }
  func.func @transform_2(%arg0: i32) -> (i32, i32) {
    %c0_i32 = arith.constant 0 : i32
    %c0_i32_0 = arith.constant 0 : i32
    %c0_i32_1 = arith.constant 0 : i32
    return %c0_i32, %c0_i32_0 : i32, i32
  }
  func.func @transform_3(%arg0: i32) -> (i32, i32) {
    %c0_i32 = arith.constant 0 : i32
    %c0_i32_0 = arith.constant 0 : i32
    %c0_i32_1 = arith.constant 0 : i32
    return %c0_i32, %c0_i32_0 : i32, i32
  }
  func.func @transform_4(%arg0: i32) -> (i32, i32) {
    %c0_i32 = arith.constant 0 : i32
    %c0_i32_0 = arith.constant 0 : i32
    %c0_i32_1 = arith.constant 0 : i32
    return %c0_i32, %c0_i32_0 : i32, i32
  }
  func.func @transform_5(%arg0: i32) -> (i32, i32) {
    %c0_i32 = arith.constant 0 : i32
    %c0_i32_0 = arith.constant 0 : i32
    %c0_i32_1 = arith.constant 0 : i32
    return %c0_i32, %c0_i32_0 : i32, i32
  }
  func.func @transform_6(%arg0: i32) -> (i32, i32) {
    %c0_i32 = arith.constant 0 : i32
    %c0_i32_0 = arith.constant 0 : i32
    %c0_i32_1 = arith.constant 0 : i32
    return %c0_i32, %c0_i32_0 : i32, i32
  }
  func.func @transform_7(%arg0: i32) -> (i32, i32) {
    %c0_i32 = arith.constant 0 : i32
    %c0_i32_0 = arith.constant 0 : i32
    %c0_i32_1 = arith.constant 0 : i32
    return %c0_i32, %c0_i32_0 : i32, i32
  }
  func.func @transform_8(%arg0: i32) -> (i32, i32) {
    %c0_i32 = arith.constant 0 : i32
    %c0_i32_0 = arith.constant 0 : i32
    %c0_i32_1 = arith.constant 0 : i32
    return %c0_i32, %c0_i32_0 : i32, i32
  }
  func.func @transform_9(%arg0: i32) -> (i32, i32) {
    %c0_i32 = arith.constant 0 : i32
    %c0_i32_0 = arith.constant 0 : i32
    %c0_i32_1 = arith.constant 0 : i32
    return %c0_i32, %c0_i32_0 : i32, i32
  }
  func.func @transform_10(%arg0: i32) -> (i32, i32) {
    %c0_i32 = arith.constant 0 : i32
    %c0_i32_0 = arith.constant 0 : i32
    %c0_i32_1 = arith.constant 0 : i32
    return %c0_i32, %c0_i32_0 : i32, i32
  }
  func.func @transform_11(%arg0: i32) -> (i32, i32) {
    %c0_i32 = arith.constant 0 : i32
    %c0_i32_0 = arith.constant 0 : i32
    %c0_i32_1 = arith.constant 0 : i32
    return %c0_i32, %c0_i32_0 : i32, i32
  }
  func.func @transform_12(%arg0: i32) -> (i32, i32) {
    %c0_i32 = arith.constant 0 : i32
    %c0_i32_0 = arith.constant 0 : i32
    %c0_i32_1 = arith.constant 0 : i32
    return %c0_i32, %c0_i32_0 : i32, i32
  }
  func.func @transform_13(%arg0: i32) -> (i32, i32, i32) {
    %c0_i32 = arith.constant 0 : i32
    %c0_i32_0 = arith.constant 0 : i32
    %c0_i32_1 = arith.constant 0 : i32
    return %arg0, %c0_i32, %c0_i32_0 : i32, i32, i32
  }
  func.func @transform_14(%arg0: i32) -> (i32, i32, i32, i32) {
    %c0_i32 = arith.constant 0 : i32
    %c0_i32_0 = arith.constant 0 : i32
    %c0_i32_1 = arith.constant 0 : i32
    %c0_i32_2 = arith.constant 0 : i32
    return %arg0, %c0_i32, %c0_i32_0, %c0_i32_1 : i32, i32, i32, i32
  }
}

</mosaic_0001>

<llo_original>
// kernel: tpu_custom_call.1
$region0: #{tpu_custom_call.1}
  #allocation0 [shape = 'u32[]', space=smem, size = 0x4, offset = 0x4, fixed_abs, tag = 'smem constant byte address 0x4 - core index']
  #allocation1 [shape = 'u32[144,128]{1,0:T(1,128)}', space=vmem, size = 0x12000, scoped, tag = 'internal scratch']
  #allocation2 [shape = 'f32[64,128]{1,0:T(8,128)}', space=vmem, size = 0x8000, scoped, tag = 'scratch operand']
  #allocation3 [shape = 'f32[64,128]{1,0:T(8,128)}', space=vmem, size = 0x8000, scoped, tag = 'scratch operand']
  #allocation4 [shape = 'f32[64,32]{1,0:T(8,128)}', space=vmem, size = 0x8000, scoped, tag = 'scratch operand']
  #allocation5 [shape = 'f32[1,1]{1,0:T(1,128)S(1)}', space=vmem, size = 0x200, scoped, tag = 'scoped memory for tpu_custom_call.1']
  %s0 = inlined_call_operand.vmem [shape: f32[1,64,32], index: 0, kind: input, shape index: {}]
  %s1 = inlined_call_operand.vmem [shape: f32[1,8,8,1], index: 1, kind: input, shape index: {}]
  %s2 = inlined_call_operand.vmem [shape: f32[32,128], index: 2, kind: input, shape index: {}]
  %s3 = inlined_call_operand.vmem [shape: f32[32,128], index: 3, kind: input, shape index: {}]
  %s4 = inlined_call_operand.vmem [shape: f32[1,128], index: 4, kind: input, shape index: {}]
  %s5 = inlined_call_operand.vmem [shape: f32[1,128], index: 5, kind: input, shape index: {}]
  %s6 = inlined_call_operand.vmem [shape: f32[32,128], index: 6, kind: input, shape index: {}]
  %s7 = inlined_call_operand.vmem [shape: f32[1,32], index: 7, kind: input, shape index: {}]
  %s8 = inlined_call_operand.vmem [shape: f32[1,32], index: 8, kind: input, shape index: {}]
  %s9 = inlined_call_operand.vmem [shape: f32[32,32], index: 9, kind: input, shape index: {}]
  %s10 = inlined_call_operand.vmem [shape: f32[1,32], index: 10, kind: input, shape index: {}]
  %s11 = inlined_call_operand.vmem [shape: f32[1,32], index: 11, kind: input, shape index: {}]
  %s12 = inlined_call_operand.<no memory space> [shape: f32[1,1], index: 12, kind: input, shape index: {}]
  %s13 = inlined_call_operand.hbm [shape: f32[1,8,32], index: 13, kind: output, shape index: {0}]
  %s14 = inlined_call_operand.vmem [shape: f32[1,8,8,1], index: 14, kind: output, shape index: {1}]
  %15 = xla_tuple %s13, %s14
  %s16 = sld [smem:[#allocation0]]
  $region70: #{tpu_custom_call.1} parent=0
    _
  %s18 = ssub.s32 1, %s16
  %s19 = scalar_select 0, %s18, %s16
  %v20 = vstv %s12
  %21 = vst [vmem:[#allocation5] sm:$0x1] %v20
  $region1: #{tpu_custom_call.1} parent=0
    #allocation6 [shape = 'u8[4096]{0}', space=vmem, size = 0x1000, scoped, tag = 'output window, operand 0, single buffered']
    #allocation7 [shape = 's32[1]{0}', space=sflag, size = 0x4, scoped, tag = 'scoped memory for tpu_custom_call.1']
    %22 = vsyncpa [#allocation7], 0
    // Predicated region
    $region2: #{tpu_custom_call.1} parent=1 // pred_check
      _
    $region3: #{tpu_custom_call.1} parent=1 // pred_check_branch
      %24 = sbr.rel (0) target = $region5
    $region4: #{tpu_custom_call.1} parent=1 // pred_region
      _
    $region5: #{tpu_custom_call.1} parent=1 // pred_fallthru
      _
    // Predicated region
    $region6: #{tpu_custom_call.1} parent=1 // pred_check
      _
    $region7: #{tpu_custom_call.1} parent=1 // pred_check_branch
      %26 = sbr.rel (0) target = $region9
    $region8: #{tpu_custom_call.1} parent=1 // pred_region
      _
    $region9: #{tpu_custom_call.1} parent=1 // pred_fallthru
      _
    // Predicated region
    $region10: #{tpu_custom_call.1} parent=1 // pred_check
      _
    $region11: #{tpu_custom_call.1} parent=1 // pred_check_branch
      %28 = sbr.rel (0) target = $region13
    $region12: #{tpu_custom_call.1} parent=1 // pred_region
      _
    $region13: #{tpu_custom_call.1} parent=1 // pred_fallthru
      _
    // Predicated region
    $region14: #{tpu_custom_call.1} parent=1 // pred_check
      _
    $region15: #{tpu_custom_call.1} parent=1 // pred_check_branch
      %30 = sbr.rel (0) target = $region17
    $region16: #{tpu_custom_call.1} parent=1 // pred_region
      _
    $region17: #{tpu_custom_call.1} parent=1 // pred_fallthru
      _
    // Predicated region
    $region18: #{tpu_custom_call.1} parent=1 // pred_check
      _
    $region19: #{tpu_custom_call.1} parent=1 // pred_check_branch
      %32 = sbr.rel (0) target = $region21
    $region20: #{tpu_custom_call.1} parent=1 // pred_region
      _
    $region21: #{tpu_custom_call.1} parent=1 // pred_fallthru
      _
    // Predicated region
    $region22: #{tpu_custom_call.1} parent=1 // pred_check
      _
    $region23: #{tpu_custom_call.1} parent=1 // pred_check_branch
      %34 = sbr.rel (0) target = $region25
    $region24: #{tpu_custom_call.1} parent=1 // pred_region
      _
    $region25: #{tpu_custom_call.1} parent=1 // pred_fallthru
      _
    // Predicated region
    $region26: #{tpu_custom_call.1} parent=1 // pred_check
      _
    $region27: #{tpu_custom_call.1} parent=1 // pred_check_branch
      %36 = sbr.rel (0) target = $region29
    $region28: #{tpu_custom_call.1} parent=1 // pred_region
      _
    $region29: #{tpu_custom_call.1} parent=1 // pred_fallthru
      _
    // Predicated region
    $region30: #{tpu_custom_call.1} parent=1 // pred_check
      _
    $region31: #{tpu_custom_call.1} parent=1 // pred_check_branch
      %38 = sbr.rel (0) target = $region33
    $region32: #{tpu_custom_call.1} parent=1 // pred_region
      _
    $region33: #{tpu_custom_call.1} parent=1 // pred_fallthru
      _
    // Predicated region
    $region34: #{tpu_custom_call.1} parent=1 // pred_check
      _
    $region35: #{tpu_custom_call.1} parent=1 // pred_check_branch
      %40 = sbr.rel (0) target = $region37
    $region36: #{tpu_custom_call.1} parent=1 // pred_region
      _
    $region37: #{tpu_custom_call.1} parent=1 // pred_fallthru
      _
    // Predicated region
    $region38: #{tpu_custom_call.1} parent=1 // pred_check
      _
    $region39: #{tpu_custom_call.1} parent=1 // pred_check_branch
      %42 = sbr.rel (0) target = $region41
    $region40: #{tpu_custom_call.1} parent=1 // pred_region
      _
    $region41: #{tpu_custom_call.1} parent=1 // pred_fallthru
      _
    // Predicated region
    $region42: #{tpu_custom_call.1} parent=1 // pred_check
      _
    $region43: #{tpu_custom_call.1} parent=1 // pred_check_branch
      %44 = sbr.rel (0) target = $region45
    $region44: #{tpu_custom_call.1} parent=1 // pred_region
      _
    $region45: #{tpu_custom_call.1} parent=1 // pred_fallthru
      _
    // Predicated region
    $region46: #{tpu_custom_call.1} parent=1 // pred_check
      _
    $region47: #{tpu_custom_call.1} parent=1 // pred_check_branch
      %46 = sbr.rel (0) target = $region49
    $region48: #{tpu_custom_call.1} parent=1 // pred_region
      _
    $region49: #{tpu_custom_call.1} parent=1 // pred_fallthru
      _
    // Predicated region
    $region50: #{tpu_custom_call.1} parent=1 // pred_check
      _
    $region51: #{tpu_custom_call.1} parent=1 // pred_check_branch
      %48 = sbr.rel (0) target = $region53
    $region52: #{tpu_custom_call.1} parent=1 // pred_region
      _
    $region53: #{tpu_custom_call.1} parent=1 // pred_fallthru
      _
    %v49 = vld [vmem:[%s0] sm:$0xff]
    %v50 = vld [vmem:[%s0 + $0x8] sm:$0xff]
    %v51 = vld [vmem:[%s0 + $0x10] sm:$0xff]
    %v52 = vld [vmem:[%s0 + $0x18] sm:$0xff]
    %v53 = vld [vmem:[%s0 + $0x20] sm:$0xff]
    %v54 = vld [vmem:[%s0 + $0x28] sm:$0xff]
    %v55 = vld [vmem:[%s0 + $0x30] sm:$0xff]
    %v56 = vld [vmem:[%s0 + $0x38] sm:$0xff]
    %v57 = vld [vmem:[%s2] sm:$0xff]
    %v58 = vld [vmem:[%s2 + $0x8] sm:$0xff]
    %v59 = vld [vmem:[%s2 + $0x10] sm:$0xff]
    %v60 = vld [vmem:[%s2 + $0x18] sm:$0xff]
    %v61 = vld [vmem:[%s4] sm:$0x1]
    %v63 = vlaneseq
    %v64 = vshrl.u32 %v63, 7
    %v65 = vsub.s32 0, %v64
    %v66 = vrot.slane %v61, %v65
    %vm68 = vcmask 261120
    %v70 = vsel %vm68, %v49, 0
    %v73 = vsel %vm68, %v50, 0
    %v76 = vsel %vm68, %v51, 0
    %v79 = vsel %vm68, %v52, 0
    %v82 = vsel %vm68, %v53, 0
    %v85 = vsel %vm68, %v54, 0
    %v88 = vsel %vm68, %v55, 0
    %v91 = vsel %vm68, %v56, 0
    %93 = vmatprep.subr.mxu0 0.0
    %94 = vmatpush1.msra.mxu0 %v57
    %95 = vmatprep.subr.mxu0 0.0
    %96 = vmatpush1.msra.mxu0 %v58
    %97 = vmatprep.subr.mxu0 0.0
    %98 = vmatpush1.msra.mxu0 %v59
    %99 = vmatprep.subr.mxu0 0.0
    %100 = vmatpush1.msra.mxu0 %v60
    %101 = vmatprep.subr.mxu0 0.0
    %102 = vmatpush1.msra.mxu0 0.0
    %103 = vmatprep.subr.mxu0 0.0
    %104 = vmatpush1.msra.mxu0 0.0
    %105 = vmatprep.subr.mxu0 0.0
    %106 = vmatpush1.msra.mxu0 0.0
    %107 = vmatprep.subr.mxu0 0.0
    %108 = vmatpush1.msra.mxu0 0.0
    %109 = vmatprep.subr.mxu0 0.0
    %110 = vmatpush1.msra.mxu0 0.0
    %111 = vmatprep.subr.mxu0 0.0
    %112 = vmatpush1.msra.mxu0 0.0
    %113 = vmatprep.subr.mxu0 0.0
    %114 = vmatpush1.msra.mxu0 0.0
    %115 = vmatprep.subr.mxu0 0.0
    %116 = vmatpush1.msra.mxu0 0.0
    %117 = vmatprep.subr.mxu0 0.0
    %118 = vmatpush1.msra.mxu0 0.0
    %119 = vmatprep.subr.mxu0 0.0
    %120 = vmatpush1.msra.mxu0 0.0
    %121 = vmatprep.subr.mxu0 0.0
    %122 = vmatpush1.msra.mxu0 0.0
    %123 = vmatprep.subr.mxu0 0.0
    %124 = vmatpush1.msra.mxu0 0.0
    %125 = vmatprep.subr.mxu0 0.0
    %126 = vmatpush1.msra.mxu0 0.0
    %127 = vmatprep.subr.mxu0 0.0
    %128 = vmatpush1.msra.mxu0 0.0
    %129 = vmatprep.subr.mxu0 0.0
    %130 = vmatpush1.msra.mxu0 0.0
    %131 = vmatprep.subr.mxu0 0.0
    %132 = vmatpush1.msra.mxu0 0.0
    %133 = vmatprep.subr.mxu0 0.0
    %134 = vmatpush1.msra.mxu0 0.0
    %135 = vmatprep.subr.mxu0 0.0
    %136 = vmatpush1.msra.mxu0 0.0
    %137 = vmatprep.subr.mxu0 0.0
    %138 = vmatpush1.msra.mxu0 0.0
    %139 = vmatprep.subr.mxu0 0.0
    %140 = vmatpush1.msra.mxu0 0.0
    %141 = vmatprep.subr.mxu0 0.0
    %142 = vmatpush1.msra.mxu0 0.0
    %143 = vmatprep.subr.mxu0 0.0
    %144 = vmatpush1.msra.mxu0 0.0
    %145 = vmatprep.subr.mxu0 0.0
    %146 = vmatpush1.msra.mxu0 0.0
    %147 = vmatprep.subr.mxu0 0.0
    %148 = vmatpush1.msra.mxu0 0.0
    %149 = vmatprep.subr.mxu0 0.0
    %150 = vmatpush1.msra.mxu0 0.0
    %151 = vmatprep.subr.mxu0 0.0
    %152 = vmatpush1.msra.mxu0 0.0
    %153 = vmatprep.subr.mxu0 0.0
    %154 = vmatpush1.msra.mxu0 0.0
    %155 = vmatprep.subr.mxu0 0.0
    %156 = vmatpush1.msra.mxu0 0.0
    %157 = vmatprep.mubr.f32.mxu0 0.0
    %158 = vmatmul.mubr.f32.gmra.mrb[0].mxu0 %v70
    %v159 = vpop.f32.mrb[0].mxu0
    %v160 = vadd.f32 %v66, %v159
    %v161 = vpop.f32.mrb[0].mxu0
    %162 = vmatprep.mubr.f32.mxu0 0.0
    %163 = vmatmul.mubr.f32.gmra.mrb[0].mxu0 %v73
    %v164 = vpop.f32.mrb[0].mxu0
    %v165 = vadd.f32 %v66, %v164
    %v166 = vpop.f32.mrb[0].mxu0
    %167 = vmatprep.mubr.f32.mxu0 0.0
    %168 = vmatmul.mubr.f32.gmra.mrb[0].mxu0 %v76
    %v169 = vpop.f32.mrb[0].mxu0
    %v170 = vadd.f32 %v66, %v169
    %v171 = vpop.f32.mrb[0].mxu0
    %172 = vmatprep.mubr.f32.mxu0 0.0
    %173 = vmatmul.mubr.f32.gmra.mrb[0].mxu0 %v79
    %v174 = vpop.f32.mrb[0].mxu0
    %v175 = vadd.f32 %v66, %v174
    %v176 = vpop.f32.mrb[0].mxu0
    %177 = vmatprep.mubr.f32.mxu0 0.0
    %178 = vmatmul.mubr.f32.gmra.mrb[0].mxu0 %v82
    %v179 = vpop.f32.mrb[0].mxu0
    %v180 = vadd.f32 %v66, %v179
    %v181 = vpop.f32.mrb[0].mxu0
    %182 = vmatprep.mubr.f32.mxu0 0.0
    %183 = vmatmul.mubr.f32.gmra.mrb[0].mxu0 %v85
    %v184 = vpop.f32.mrb[0].mxu0
    %v185 = vadd.f32 %v66, %v184
    %v186 = vpop.f32.mrb[0].mxu0
    %187 = vmatprep.mubr.f32.mxu0 0.0
    %188 = vmatmul.mubr.f32.gmra.mrb[0].mxu0 %v88
    %v189 = vpop.f32.mrb[0].mxu0
    %v190 = vadd.f32 %v66, %v189
    %v191 = vpop.f32.mrb[0].mxu0
    %192 = vmatprep.mubr.f32.mxu0 0.0
    %193 = vmatmul.mubr.f32.gmra.mrb[0].mxu0 %v91
    %v194 = vpop.f32.mrb[0].mxu0
    %v195 = vadd.f32 %v66, %v194
    %v196 = vpop.f32.mrb[0].mxu0
    %197 = vdwg.mxu0
    %198 = vst [vmem:[#allocation2] sm:$0xff] %v160
    %199 = vst [vmem:[#allocation2 + $0x8] sm:$0xff] %v165
    %200 = vst [vmem:[#allocation2 + $0x10] sm:$0xff] %v170
    %201 = vst [vmem:[#allocation2 + $0x18] sm:$0xff] %v175
    %202 = vst [vmem:[#allocation2 + $0x20] sm:$0xff] %v180
    %203 = vst [vmem:[#allocation2 + $0x28] sm:$0xff] %v185
    %204 = vst [vmem:[#allocation2 + $0x30] sm:$0xff] %v190
    %205 = vst [vmem:[#allocation2 + $0x38] sm:$0xff] %v195
    %v206 = vld [vmem:[%s3] sm:$0xff]
    %v207 = vld [vmem:[%s3 + $0x8] sm:$0xff]
    %v208 = vld [vmem:[%s3 + $0x10] sm:$0xff]
    %v209 = vld [vmem:[%s3 + $0x18] sm:$0xff]
    %v210 = vld [vmem:[%s5] sm:$0x1]
    %v212 = vlaneseq
    %v213 = vshrl.u32 %v212, 7
    %v214 = vsub.s32 0, %v213
    %v215 = vrot.slane %v210, %v214
    %217 = vmatprep.subr.mxu0 0.0
    %218 = vmatpush1.msra.mxu0 %v206
    %219 = vmatprep.subr.mxu0 0.0
    %220 = vmatpush1.msra.mxu0 %v207
    %221 = vmatprep.subr.mxu0 0.0
    %222 = vmatpush1.msra.mxu0 %v208
    %223 = vmatprep.subr.mxu0 0.0
    %224 = vmatpush1.msra.mxu0 %v209
    %225 = vmatprep.subr.mxu0 0.0
    %226 = vmatpush1.msra.mxu0 0.0
    %227 = vmatprep.subr.mxu0 0.0
    %228 = vmatpush1.msra.mxu0 0.0
    %229 = vmatprep.subr.mxu0 0.0
    %230 = vmatpush1.msra.mxu0 0.0
    %231 = vmatprep.subr.mxu0 0.0
    %232 = vmatpush1.msra.mxu0 0.0
    %233 = vmatprep.subr.mxu0 0.0
    %234 = vmatpush1.msra.mxu0 0.0
    %235 = vmatprep.subr.mxu0 0.0
    %236 = vmatpush1.msra.mxu0 0.0
    %237 = vmatprep.subr.mxu0 0.0
    %238 = vmatpush1.msra.mxu0 0.0
    %239 = vmatprep.subr.mxu0 0.0
    %240 = vmatpush1.msra.mxu0 0.0
    %241 = vmatprep.subr.mxu0 0.0
    %242 = vmatpush1.msra.mxu0 0.0
    %243 = vmatprep.subr.mxu0 0.0
    %244 = vmatpush1.msra.mxu0 0.0
    %245 = vmatprep.subr.mxu0 0.0
    %246 = vmatpush1.msra.mxu0 0.0
    %247 = vmatprep.subr.mxu0 0.0
    %248 = vmatpush1.msra.mxu0 0.0
    %249 = vmatprep.subr.mxu0 0.0
    %250 = vmatpush1.msra.mxu0 0.0
    %251 = vmatprep.subr.mxu0 0.0
    %252 = vmatpush1.msra.mxu0 0.0
    %253 = vmatprep.subr.mxu0 0.0
    %254 = vmatpush1.msra.mxu0 0.0
    %255 = vmatprep.subr.mxu0 0.0
    %256 = vmatpush1.msra.mxu0 0.0
    %257 = vmatprep.subr.mxu0 0.0
    %258 = vmatpush1.msra.mxu0 0.0
    %259 = vmatprep.subr.mxu0 0.0
    %260 = vmatpush1.msra.mxu0 0.0
    %261 = vmatprep.subr.mxu0 0.0
    %262 = vmatpush1.msra.mxu0 0.0
    %263 = vmatprep.subr.mxu0 0.0
    %264 = vmatpush1.msra.mxu0 0.0
    %265 = vmatprep.subr.mxu0 0.0
    %266 = vmatpush1.msra.mxu0 0.0
    %267 = vmatprep.subr.mxu0 0.0
    %268 = vmatpush1.msra.mxu0 0.0
    %269 = vmatprep.subr.mxu0 0.0
    %270 = vmatpush1.msra.mxu0 0.0
    %271 = vmatprep.subr.mxu0 0.0
    %272 = vmatpush1.msra.mxu0 0.0
    %273 = vmatprep.subr.mxu0 0.0
    %274 = vmatpush1.msra.mxu0 0.0
    %275 = vmatprep.subr.mxu0 0.0
    %276 = vmatpush1.msra.mxu0 0.0
    %277 = vmatprep.subr.mxu0 0.0
    %278 = vmatpush1.msra.mxu0 0.0
    %279 = vmatprep.subr.mxu0 0.0
    %280 = vmatpush1.msra.mxu0 0.0
    %281 = vmatprep.mubr.f32.mxu0 0.0
    %282 = vmatmul.mubr.f32.gmra.mrb[0].mxu0 %v70
    %v283 = vpop.f32.mrb[0].mxu0
    %v284 = vadd.f32 %v215, %v283
    %v285 = vpop.f32.mrb[0].mxu0
    %286 = vmatprep.mubr.f32.mxu0 0.0
    %287 = vmatmul.mubr.f32.gmra.mrb[0].mxu0 %v73
    %v288 = vpop.f32.mrb[0].mxu0
    %v289 = vadd.f32 %v215, %v288
    %v290 = vpop.f32.mrb[0].mxu0
    %291 = vmatprep.mubr.f32.mxu0 0.0
    %292 = vmatmul.mubr.f32.gmra.mrb[0].mxu0 %v76
    %v293 = vpop.f32.mrb[0].mxu0
    %v294 = vadd.f32 %v215, %v293
    %v295 = vpop.f32.mrb[0].mxu0
    %296 = vmatprep.mubr.f32.mxu0 0.0
    %297 = vmatmul.mubr.f32.gmra.mrb[0].mxu0 %v79
    %v298 = vpop.f32.mrb[0].mxu0
    %v299 = vadd.f32 %v215, %v298
    %v300 = vpop.f32.mrb[0].mxu0
    %301 = vmatprep.mubr.f32.mxu0 0.0
    %302 = vmatmul.mubr.f32.gmra.mrb[0].mxu0 %v82
    %v303 = vpop.f32.mrb[0].mxu0
    %v304 = vadd.f32 %v215, %v303
    %v305 = vpop.f32.mrb[0].mxu0
    %306 = vmatprep.mubr.f32.mxu0 0.0
    %307 = vmatmul.mubr.f32.gmra.mrb[0].mxu0 %v85
    %v308 = vpop.f32.mrb[0].mxu0
    %v309 = vadd.f32 %v215, %v308
    %v310 = vpop.f32.mrb[0].mxu0
    %311 = vmatprep.mubr.f32.mxu0 0.0
    %312 = vmatmul.mubr.f32.gmra.mrb[0].mxu0 %v88
    %v313 = vpop.f32.mrb[0].mxu0
    %v314 = vadd.f32 %v215, %v313
    %v315 = vpop.f32.mrb[0].mxu0
    %316 = vmatprep.mubr.f32.mxu0 0.0
    %317 = vmatmul.mubr.f32.gmra.mrb[0].mxu0 %v91
    %v318 = vpop.f32.mrb[0].mxu0
    %v319 = vadd.f32 %v215, %v318
    %v320 = vpop.f32.mrb[0].mxu0
    %321 = vdwg.mxu0
    %322 = vst [vmem:[#allocation3] sm:$0xff] %v284
    %323 = vst [vmem:[#allocation3 + $0x8] sm:$0xff] %v289
    %324 = vst [vmem:[#allocation3 + $0x10] sm:$0xff] %v294
    %325 = vst [vmem:[#allocation3 + $0x18] sm:$0xff] %v299
    %326 = vst [vmem:[#allocation3 + $0x20] sm:$0xff] %v304
    %327 = vst [vmem:[#allocation3 + $0x28] sm:$0xff] %v309
    %328 = vst [vmem:[#allocation3 + $0x30] sm:$0xff] %v314
    %329 = vst [vmem:[#allocation3 + $0x38] sm:$0xff] %v319
    %v330 = vld [vmem:[%s6] sm:$0xff]
    %v331 = vld [vmem:[%s6 + $0x8] sm:$0xff]
    %v332 = vld [vmem:[%s6 + $0x10] sm:$0xff]
    %v333 = vld [vmem:[%s6 + $0x18] sm:$0xff]
    %v334 = vld [vmem:[#allocation2] sm:$0xff]
    %s335 = scalar_lea.vmem [#allocation3], 56
    %v336 = vld [vmem:[%s335] sm:$0xff]
    %v337 = vadd.f32 %v334, %v336
    %v339 = vsel %vm68, 0.0, 0
    %341 = vmatprep.subr.mxu0 0.0
    %342 = vmatpush1.msra.mxu0 %v330
    %343 = vmatprep.subr.mxu0 0.0
    %344 = vmatpush1.msra.mxu0 %v331
    %345 = vmatprep.subr.mxu0 0.0
    %346 = vmatpush1.msra.mxu0 %v332
    %347 = vmatprep.subr.mxu0 0.0
    %348 = vmatpush1.msra.mxu0 %v333
    %349 = vmatprep.subr.mxu0 0.0
    %350 = vmatpush1.msra.mxu0 0.0
    %351 = vmatprep.subr.mxu0 0.0
    %352 = vmatpush1.msra.mxu0 0.0
    %353 = vmatprep.subr.mxu0 0.0
    %354 = vmatpush1.msra.mxu0 0.0
    %355 = vmatprep.subr.mxu0 0.0
    %356 = vmatpush1.msra.mxu0 0.0
    %357 = vmatprep.subr.mxu0 0.0
    %358 = vmatpush1.msra.mxu0 0.0
    %359 = vmatprep.subr.mxu0 0.0
    %360 = vmatpush1.msra.mxu0 0.0
    %361 = vmatprep.subr.mxu0 0.0
    %362 = vmatpush1.msra.mxu0 0.0
    %363 = vmatprep.subr.mxu0 0.0
    %364 = vmatpush1.msra.mxu0 0.0
    %365 = vmatprep.subr.mxu0 0.0
    %366 = vmatpush1.msra.mxu0 0.0
    %367 = vmatprep.subr.mxu0 0.0
    %368 = vmatpush1.msra.mxu0 0.0
    %369 = vmatprep.subr.mxu0 0.0
    %370 = vmatpush1.msra.mxu0 0.0
    %371 = vmatprep.subr.mxu0 0.0
    %372 = vmatpush1.msra.mxu0 0.0
    %373 = vmatprep.subr.mxu0 0.0
    %374 = vmatpush1.msra.mxu0 0.0
    %375 = vmatprep.subr.mxu0 0.0
    %376 = vmatpush1.msra.mxu0 0.0
    %377 = vmatprep.subr.mxu0 0.0
    %378 = vmatpush1.msra.mxu0 0.0
    %379 = vmatprep.subr.mxu0 0.0
    %380 = vmatpush1.msra.mxu0 0.0
    %381 = vmatprep.subr.mxu0 0.0
    %382 = vmatpush1.msra.mxu0 0.0
    %383 = vmatprep.subr.mxu0 0.0
    %384 = vmatpush1.msra.mxu0 0.0
    %385 = vmatprep.subr.mxu0 0.0
    %386 = vmatpush1.msra.mxu0 0.0
    %387 = vmatprep.subr.mxu0 0.0
    %388 = vmatpush1.msra.mxu0 0.0
    %389 = vmatprep.subr.mxu0 0.0
    %390 = vmatpush1.msra.mxu0 0.0
    %391 = vmatprep.subr.mxu0 0.0
    %392 = vmatpush1.msra.mxu0 0.0
    %393 = vmatprep.subr.mxu0 0.0
    %394 = vmatpush1.msra.mxu0 0.0
    %395 = vmatprep.subr.mxu0 0.0
    %396 = vmatpush1.msra.mxu0 0.0
    %397 = vmatprep.subr.mxu0 0.0
    %398 = vmatpush1.msra.mxu0 0.0
    %399 = vmatprep.subr.mxu0 0.0
    %400 = vmatpush1.msra.mxu0 0.0
    %401 = vmatprep.subr.mxu0 0.0
    %402 = vmatpush1.msra.mxu0 0.0
    %403 = vmatprep.subr.mxu0 0.0
    %404 = vmatpush1.msra.mxu0 0.0
    %405 = vmatprep.mubr.f32.mxu0 0.0
    %406 = vmatmul.mubr.f32.gmra.mrb[0].mxu0 %v339
    %v407 = vpop.f32.mrb[0].mxu0
    %v408 = vadd.f32 0.0, %v407
    %v409 = vpop.f32.mrb[0].mxu0
    %410 = vdwg.mxu0
    %v411 = vadd.f32 %v337, %v408
    %v412 = vxor.u32 %v411, 2147483648
    %v413 = vmul.f32 %v412, 1.442695
    %v414 = vpow.pop %v413
    %v415 = vadd.f32 %v414, 1.0
    %v416 = vrcp.pop %v415
    %v417 = vmul.f32 1.0, %v416
    %v418 = vtanh.pop %v411
    %v419 = vmul.f32 %v417, 0.0
    %421 = vrot.lane.b32.xlu0 %v418, 64
    %v422 = vpop.permute.xlu0 %421
    %v424 = vmul.f32 %v417, %v422
    %426 = vrot.lane.b32.xlu0 %v424, 32
    %v427 = vpop.permute.xlu0 %426
    %v429 = vadd.f32 %v419, %v427
    %v430 = vtanh.pop %v429
    %432 = vrot.lane.b32.xlu0 %v430, 64
    %v433 = vpop.permute.xlu0 %432
    %v435 = vmul.f32 %v417, %v433
    %437 = vrot.lane.b32.xlu0 %v435, 32
    %v438 = vpop.permute.xlu0 %437
    %vm440 = vcmask 130048
    %441 = vst.msk [vmem:[#allocation4] sm:$0xff] %vm440, %v438
    %s442 = scalar_lea.vmem [#allocation4], 56
    %vm443 = vcmask 261248
    %444 = vst.msk [vmem:[%s442] sm:$0xff] %vm443, %v438
    %s445 = scalar_lea.vmem [#allocation2], 8
    %v446 = vld [vmem:[%s445] sm:$0xff]
    %s447 = scalar_lea.vmem [#allocation3], 48
    %v448 = vld [vmem:[%s447] sm:$0xff]
    %v449 = vadd.f32 %v446, %v448
    %v450 = vsel %vm68, %v438, 0
    %452 = vmatprep.subr.mxu0 0.0
    %453 = vmatpush1.msra.mxu0 %v330
    %454 = vmatprep.subr.mxu0 0.0
    %455 = vmatpush1.msra.mxu0 %v331
    %456 = vmatprep.subr.mxu0 0.0
    %457 = vmatpush1.msra.mxu0 %v332
    %458 = vmatprep.subr.mxu0 0.0
    %459 = vmatpush1.msra.mxu0 %v333
    %460 = vmatprep.subr.mxu0 0.0
    %461 = vmatpush1.msra.mxu0 0.0
    %462 = vmatprep.subr.mxu0 0.0
    %463 = vmatpush1.msra.mxu0 0.0
    %464 = vmatprep.subr.mxu0 0.0
    %465 = vmatpush1.msra.mxu0 0.0
    %466 = vmatprep.subr.mxu0 0.0
    %467 = vmatpush1.msra.mxu0 0.0
    %468 = vmatprep.subr.mxu0 0.0
    %469 = vmatpush1.msra.mxu0 0.0
    %470 = vmatprep.subr.mxu0 0.0
    %471 = vmatpush1.msra.mxu0 0.0
    %472 = vmatprep.subr.mxu0 0.0
    %473 = vmatpush1.msra.mxu0 0.0
    %474 = vmatprep.subr.mxu0 0.0
    %475 = vmatpush1.msra.mxu0 0.0
    %476 = vmatprep.subr.mxu0 0.0
    %477 = vmatpush1.msra.mxu0 0.0
    %478 = vmatprep.subr.mxu0 0.0
    %479 = vmatpush1.msra.mxu0 0.0
    %480 = vmatprep.subr.mxu0 0.0
    %481 = vmatpush1.msra.mxu0 0.0
    %482 = vmatprep.subr.mxu0 0.0
    %483 = vmatpush1.msra.mxu0 0.0
    %484 = vmatprep.subr.mxu0 0.0
    %485 = vmatpush1.msra.mxu0 0.0
    %486 = vmatprep.subr.mxu0 0.0
    %487 = vmatpush1.msra.mxu0 0.0
    %488 = vmatprep.subr.mxu0 0.0
    %489 = vmatpush1.msra.mxu0 0.0
    %490 = vmatprep.subr.mxu0 0.0
    %491 = vmatpush1.msra.mxu0 0.0
    %492 = vmatprep.subr.mxu0 0.0
    %493 = vmatpush1.msra.mxu0 0.0
    %494 = vmatprep.subr.mxu0 0.0
    %495 = vmatpush1.msra.mxu0 0.0
    %496 = vmatprep.subr.mxu0 0.0
    %497 = vmatpush1.msra.mxu0 0.0
    %498 = vmatprep.subr.mxu0 0.0
    %499 = vmatpush1.msra.mxu0 0.0
    %500 = vmatprep.subr.mxu0 0.0
    %501 = vmatpush1.msra.mxu0 0.0
    %502 = vmatprep.subr.mxu0 0.0
    %503 = vmatpush1.msra.mxu0 0.0
    %504 = vmatprep.subr.mxu0 0.0
    %505 = vmatpush1.msra.mxu0 0.0
    %506 = vmatprep.subr.mxu0 0.0
    %507 = vmatpush1.msra.mxu0 0.0
    %508 = vmatprep.subr.mxu0 0.0
    %509 = vmatpush1.msra.mxu0 0.0
    %510 = vmatprep.subr.mxu0 0.0
    %511 = vmatpush1.msra.mxu0 0.0
    %512 = vmatprep.subr.mxu0 0.0
    %513 = vmatpush1.msra.mxu0 0.0
    %514 = vmatprep.subr.mxu0 0.0
    %515 = vmatpush1.msra.mxu0 0.0
    %516 = vmatprep.mubr.f32.mxu0 0.0
    %517 = vmatmul.mubr.f32.gmra.mrb[0].mxu0 %v450
    %v518 = vpop.f32.mrb[0].mxu0
    %v519 = vadd.f32 0.0, %v518
    %v520 = vpop.f32.mrb[0].mxu0
    %521 = vdwg.mxu0
    %v522 = vadd.f32 %v449, %v519
    %v523 = vxor.u32 %v522, 2147483648
    %v524 = vmul.f32 %v523, 1.442695
    %v525 = vpow.pop %v524
    %v526 = vadd.f32 %v525, 1.0
    %v527 = vrcp.pop %v526
    %v528 = vmul.f32 1.0, %v527
    %v529 = vtanh.pop %v522
    %v530 = vmul.f32 %v528, %v429
    %532 = vrot.lane.b32.xlu0 %v529, 64
    %v533 = vpop.permute.xlu0 %532
    %v535 = vmul.f32 %v528, %v533
    %537 = vrot.lane.b32.xlu0 %v535, 32
    %v538 = vpop.permute.xlu0 %537
    %v540 = vadd.f32 %v530, %v538
    %v541 = vtanh.pop %v540
    %543 = vrot.lane.b32.xlu0 %v541, 64
    %v544 = vpop.permute.xlu0 %543
    %v546 = vmul.f32 %v528, %v544
    %548 = vrot.lane.b32.xlu0 %v546, 32
    %v549 = vpop.permute.xlu0 %548
    %s551 = scalar_lea.vmem [#allocation4], 8
    %552 = vst.msk [vmem:[%s551] sm:$0xff] %vm440, %v549
    %s553 = scalar_lea.vmem [#allocation4], 48
    %554 = vst.msk [vmem:[%s553] sm:$0xff] %vm443, %v549
    %s555 = scalar_lea.vmem [#allocation2], 16
    %v556 = vld [vmem:[%s555] sm:$0xff]
    %s557 = scalar_lea.vmem [#allocation3], 40
    %v558 = vld [vmem:[%s557] sm:$0xff]
    %v559 = vadd.f32 %v556, %v558
    %v560 = vsel %vm68, %v549, 0
    %562 = vmatprep.subr.mxu0 0.0
    %563 = vmatpush1.msra.mxu0 %v330
    %564 = vmatprep.subr.mxu0 0.0
    %565 = vmatpush1.msra.mxu0 %v331
    %566 = vmatprep.subr.mxu0 0.0
    %567 = vmatpush1.msra.mxu0 %v332
    %568 = vmatprep.subr.mxu0 0.0
    %569 = vmatpush1.msra.mxu0 %v333
    %570 = vmatprep.subr.mxu0 0.0
    %571 = vmatpush1.msra.mxu0 0.0
    %572 = vmatprep.subr.mxu0 0.0
    %573 = vmatpush1.msra.mxu0 0.0
    %574 = vmatprep.subr.mxu0 0.0
    %575 = vmatpush1.msra.mxu0 0.0
    %576 = vmatprep.subr.mxu0 0.0
    %577 = vmatpush1.msra.mxu0 0.0
    %578 = vmatprep.subr.mxu0 0.0
    %579 = vmatpush1.msra.mxu0 0.0
    %580 = vmatprep.subr.mxu0 0.0
    %581 = vmatpush1.msra.mxu0 0.0
    %582 = vmatprep.subr.mxu0 0.0
    %583 = vmatpush1.msra.mxu0 0.0
    %584 = vmatprep.subr.mxu0 0.0
    %585 = vmatpush1.msra.mxu0 0.0
    %586 = vmatprep.subr.mxu0 0.0
    %587 = vmatpush1.msra.mxu0 0.0
    %588 = vmatprep.subr.mxu0 0.0
    %589 = vmatpush1.msra.mxu0 0.0
    %590 = vmatprep.subr.mxu0 0.0
    %591 = vmatpush1.msra.mxu0 0.0
    %592 = vmatprep.subr.mxu0 0.0
    %593 = vmatpush1.msra.mxu0 0.0
    %594 = vmatprep.subr.mxu0 0.0
    %595 = vmatpush1.msra.mxu0 0.0
    %596 = vmatprep.subr.mxu0 0.0
    %597 = vmatpush1.msra.mxu0 0.0
    %598 = vmatprep.subr.mxu0 0.0
    %599 = vmatpush1.msra.mxu0 0.0
    %600 = vmatprep.subr.mxu0 0.0
    %601 = vmatpush1.msra.mxu0 0.0
    %602 = vmatprep.subr.mxu0 0.0
    %603 = vmatpush1.msra.mxu0 0.0
    %604 = vmatprep.subr.mxu0 0.0
    %605 = vmatpush1.msra.mxu0 0.0
    %606 = vmatprep.subr.mxu0 0.0
    %607 = vmatpush1.msra.mxu0 0.0
    %608 = vmatprep.subr.mxu0 0.0
    %609 = vmatpush1.msra.mxu0 0.0
    %610 = vmatprep.subr.mxu0 0.0
    %611 = vmatpush1.msra.mxu0 0.0
    %612 = vmatprep.subr.mxu0 0.0
    %613 = vmatpush1.msra.mxu0 0.0
    %614 = vmatprep.subr.mxu0 0.0
    %615 = vmatpush1.msra.mxu0 0.0
    %616 = vmatprep.subr.mxu0 0.0
    %617 = vmatpush1.msra.mxu0 0.0
    %618 = vmatprep.subr.mxu0 0.0
    %619 = vmatpush1.msra.mxu0 0.0
    %620 = vmatprep.subr.mxu0 0.0
    %621 = vmatpush1.msra.mxu0 0.0
    %622 = vmatprep.subr.mxu0 0.0
    %623 = vmatpush1.msra.mxu0 0.0
    %624 = vmatprep.subr.mxu0 0.0
    %625 = vmatpush1.msra.mxu0 0.0
    %626 = vmatprep.mubr.f32.mxu0 0.0
    %627 = vmatmul.mubr.f32.gmra.mrb[0].mxu0 %v560
    %v628 = vpop.f32.mrb[0].mxu0
    %v629 = vadd.f32 0.0, %v628
    %v630 = vpop.f32.mrb[0].mxu0
    %631 = vdwg.mxu0
    %v632 = vadd.f32 %v559, %v629
    %v633 = vxor.u32 %v632, 2147483648
    %v634 = vmul.f32 %v633, 1.442695
    %v635 = vpow.pop %v634
    %v636 = vadd.f32 %v635, 1.0
    %v637 = vrcp.pop %v636
    %v638 = vmul.f32 1.0, %v637
    %v639 = vtanh.pop %v632
    %v640 = vmul.f32 %v638, %v540
    %642 = vrot.lane.b32.xlu0 %v639, 64
    %v643 = vpop.permute.xlu0 %642
    %v645 = vmul.f32 %v638, %v643
    %647 = vrot.lane.b32.xlu0 %v645, 32
    %v648 = vpop.permute.xlu0 %647
    %v650 = vadd.f32 %v640, %v648
    %v651 = vtanh.pop %v650
    %653 = vrot.lane.b32.xlu0 %v651, 64
    %v654 = vpop.permute.xlu0 %653
    %v656 = vmul.f32 %v638, %v654
    %658 = vrot.lane.b32.xlu0 %v656, 32
    %v659 = vpop.permute.xlu0 %658
    %s661 = scalar_lea.vmem [#allocation4], 16
    %662 = vst.msk [vmem:[%s661] sm:$0xff] %vm440, %v659
    %s663 = scalar_lea.vmem [#allocation4], 40
    %664 = vst.msk [vmem:[%s663] sm:$0xff] %vm443, %v659
    %s665 = scalar_lea.vmem [#allocation2], 24
    %v666 = vld [vmem:[%s665] sm:$0xff]
    %s667 = scalar_lea.vmem [#allocation3], 32
    %v668 = vld [vmem:[%s667] sm:$0xff]
    %v669 = vadd.f32 %v666, %v668
    %v670 = vsel %vm68, %v659, 0
    %672 = vmatprep.subr.mxu0 0.0
    %673 = vmatpush1.msra.mxu0 %v330
    %674 = vmatprep.subr.mxu0 0.0
    %675 = vmatpush1.msra.mxu0 %v331
    %676 = vmatprep.subr.mxu0 0.0
    %677 = vmatpush1.msra.mxu0 %v332
    %678 = vmatprep.subr.mxu0 0.0
    %679 = vmatpush1.msra.mxu0 %v333
    %680 = vmatprep.subr.mxu0 0.0
    %681 = vmatpush1.msra.mxu0 0.0
    %682 = vmatprep.subr.mxu0 0.0
    %683 = vmatpush1.msra.mxu0 0.0
    %684 = vmatprep.subr.mxu0 0.0
    %685 = vmatpush1.msra.mxu0 0.0
    %686 = vmatprep.subr.mxu0 0.0
    %687 = vmatpush1.msra.mxu0 0.0
    %688 = vmatprep.subr.mxu0 0.0
    %689 = vmatpush1.msra.mxu0 0.0
    %690 = vmatprep.subr.mxu0 0.0
    %691 = vmatpush1.msra.mxu0 0.0
    %692 = vmatprep.subr.mxu0 0.0
    %693 = vmatpush1.msra.mxu0 0.0
    %694 = vmatprep.subr.mxu0 0.0
    %695 = vmatpush1.msra.mxu0 0.0
    %696 = vmatprep.subr.mxu0 0.0
    %697 = vmatpush1.msra.mxu0 0.0
    %698 = vmatprep.subr.mxu0 0.0
    %699 = vmatpush1.msra.mxu0 0.0
    %700 = vmatprep.subr.mxu0 0.0
    %701 = vmatpush1.msra.mxu0 0.0
    %702 = vmatprep.subr.mxu0 0.0
    %703 = vmatpush1.msra.mxu0 0.0
    %704 = vmatprep.subr.mxu0 0.0
    %705 = vmatpush1.msra.mxu0 0.0
    %706 = vmatprep.subr.mxu0 0.0
    %707 = vmatpush1.msra.mxu0 0.0
    %708 = vmatprep.subr.mxu0 0.0
    %709 = vmatpush1.msra.mxu0 0.0
    %710 = vmatprep.subr.mxu0 0.0
    %711 = vmatpush1.msra.mxu0 0.0
    %712 = vmatprep.subr.mxu0 0.0
    %713 = vmatpush1.msra.mxu0 0.0
    %714 = vmatprep.subr.mxu0 0.0
    %715 = vmatpush1.msra.mxu0 0.0
    %716 = vmatprep.subr.mxu0 0.0
    %717 = vmatpush1.msra.mxu0 0.0
    %718 = vmatprep.subr.mxu0 0.0
    %719 = vmatpush1.msra.mxu0 0.0
    %720 = vmatprep.subr.mxu0 0.0
    %721 = vmatpush1.msra.mxu0 0.0
    %722 = vmatprep.subr.mxu0 0.0
    %723 = vmatpush1.msra.mxu0 0.0
    %724 = vmatprep.subr.mxu0 0.0
    %725 = vmatpush1.msra.mxu0 0.0
    %726 = vmatprep.subr.mxu0 0.0
    %727 = vmatpush1.msra.mxu0 0.0
    %728 = vmatprep.subr.mxu0 0.0
    %729 = vmatpush1.msra.mxu0 0.0
    %730 = vmatprep.subr.mxu0 0.0
    %731 = vmatpush1.msra.mxu0 0.0
    %732 = vmatprep.subr.mxu0 0.0
    %733 = vmatpush1.msra.mxu0 0.0
    %734 = vmatprep.subr.mxu0 0.0
    %735 = vmatpush1.msra.mxu0 0.0
    %736 = vmatprep.mubr.f32.mxu0 0.0
    %737 = vmatmul.mubr.f32.gmra.mrb[0].mxu0 %v670
    %v738 = vpop.f32.mrb[0].mxu0
    %v739 = vadd.f32 0.0, %v738
    %v740 = vpop.f32.mrb[0].mxu0
    %741 = vdwg.mxu0
    %v742 = vadd.f32 %v669, %v739
    %v743 = vxor.u32 %v742, 2147483648
    %v744 = vmul.f32 %v743, 1.442695
    %v745 = vpow.pop %v744
    %v746 = vadd.f32 %v745, 1.0
    %v747 = vrcp.pop %v746
    %v748 = vmul.f32 1.0, %v747
    %v749 = vtanh.pop %v742
    %v750 = vmul.f32 %v748, %v650
    %752 = vrot.lane.b32.xlu0 %v749, 64
    %v753 = vpop.permute.xlu0 %752
    %v755 = vmul.f32 %v748, %v753
    %757 = vrot.lane.b32.xlu0 %v755, 32
    %v758 = vpop.permute.xlu0 %757
    %v760 = vadd.f32 %v750, %v758
    %v761 = vtanh.pop %v760
    %763 = vrot.lane.b32.xlu0 %v761, 64
    %v764 = vpop.permute.xlu0 %763
    %v766 = vmul.f32 %v748, %v764
    %768 = vrot.lane.b32.xlu0 %v766, 32
    %v769 = vpop.permute.xlu0 %768
    %s771 = scalar_lea.vmem [#allocation4], 24
    %772 = vst.msk [vmem:[%s771] sm:$0xff] %vm440, %v769
    %s773 = scalar_lea.vmem [#allocation4], 32
    %774 = vst.msk [vmem:[%s773] sm:$0xff] %vm443, %v769
    %s775 = scalar_lea.vmem [#allocation2], 32
    %v776 = vld [vmem:[%s775] sm:$0xff]
    %s777 = scalar_lea.vmem [#allocation3], 24
    %v778 = vld [vmem:[%s777] sm:$0xff]
    %v779 = vadd.f32 %v776, %v778
    %v780 = vsel %vm68, %v769, 0
    %782 = vmatprep.subr.mxu0 0.0
    %783 = vmatpush1.msra.mxu0 %v330
    %784 = vmatprep.subr.mxu0 0.0
    %785 = vmatpush1.msra.mxu0 %v331
    %786 = vmatprep.subr.mxu0 0.0
    %787 = vmatpush1.msra.mxu0 %v332
    %788 = vmatprep.subr.mxu0 0.0
    %789 = vmatpush1.msra.mxu0 %v333
    %790 = vmatprep.subr.mxu0 0.0
    %791 = vmatpush1.msra.mxu0 0.0
    %792 = vmatprep.subr.mxu0 0.0
    %793 = vmatpush1.msra.mxu0 0.0
    %794 = vmatprep.subr.mxu0 0.0
    %795 = vmatpush1.msra.mxu0 0.0
    %796 = vmatprep.subr.mxu0 0.0
    %797 = vmatpush1.msra.mxu0 0.0
    %798 = vmatprep.subr.mxu0 0.0
    %799 = vmatpush1.msra.mxu0 0.0
    %800 = vmatprep.subr.mxu0 0.0
    %801 = vmatpush1.msra.mxu0 0.0
    %802 = vmatprep.subr.mxu0 0.0
    %803 = vmatpush1.msra.mxu0 0.0
    %804 = vmatprep.subr.mxu0 0.0
    %805 = vmatpush1.msra.mxu0 0.0
    %806 = vmatprep.subr.mxu0 0.0
    %807 = vmatpush1.msra.mxu0 0.0
    %808 = vmatprep.subr.mxu0 0.0
    %809 = vmatpush1.msra.mxu0 0.0
    %810 = vmatprep.subr.mxu0 0.0
    %811 = vmatpush1.msra.mxu0 0.0
    %812 = vmatprep.subr.mxu0 0.0
    %813 = vmatpush1.msra.mxu0 0.0
    %814 = vmatprep.subr.mxu0 0.0
    %815 = vmatpush1.msra.mxu0 0.0
    %816 = vmatprep.subr.mxu0 0.0
    %817 = vmatpush1.msra.mxu0 0.0
    %818 = vmatprep.subr.mxu0 0.0
    %819 = vmatpush1.msra.mxu0 0.0
    %820 = vmatprep.subr.mxu0 0.0
    %821 = vmatpush1.msra.mxu0 0.0
    %822 = vmatprep.subr.mxu0 0.0
    %823 = vmatpush1.msra.mxu0 0.0
    %824 = vmatprep.subr.mxu0 0.0
    %825 = vmatpush1.msra.mxu0 0.0
    %826 = vmatprep.subr.mxu0 0.0
    %827 = vmatpush1.msra.mxu0 0.0
    %828 = vmatprep.subr.mxu0 0.0
    %829 = vmatpush1.msra.mxu0 0.0
    %830 = vmatprep.subr.mxu0 0.0
    %831 = vmatpush1.msra.mxu0 0.0
    %832 = vmatprep.subr.mxu0 0.0
    %833 = vmatpush1.msra.mxu0 0.0
    %834 = vmatprep.subr.mxu0 0.0
    %835 = vmatpush1.msra.mxu0 0.0
    %836 = vmatprep.subr.mxu0 0.0
    %837 = vmatpush1.msra.mxu0 0.0
    %838 = vmatprep.subr.mxu0 0.0
    %839 = vmatpush1.msra.mxu0 0.0
    %840 = vmatprep.subr.mxu0 0.0
    %841 = vmatpush1.msra.mxu0 0.0
    %842 = vmatprep.subr.mxu0 0.0
    %843 = vmatpush1.msra.mxu0 0.0
    %844 = vmatprep.subr.mxu0 0.0
    %845 = vmatpush1.msra.mxu0 0.0
    %846 = vmatprep.mubr.f32.mxu0 0.0
    %847 = vmatmul.mubr.f32.gmra.mrb[0].mxu0 %v780
    %v848 = vpop.f32.mrb[0].mxu0
    %v849 = vadd.f32 0.0, %v848
    %v850 = vpop.f32.mrb[0].mxu0
    %851 = vdwg.mxu0
    %v852 = vadd.f32 %v779, %v849
    %v853 = vxor.u32 %v852, 2147483648
    %v854 = vmul.f32 %v853, 1.442695
    %v855 = vpow.pop %v854
    %v856 = vadd.f32 %v855, 1.0
    %v857 = vrcp.pop %v856
    %v858 = vmul.f32 1.0, %v857
    %v859 = vtanh.pop %v852
    %v860 = vmul.f32 %v858, %v760
    %862 = vrot.lane.b32.xlu0 %v859, 64
    %v863 = vpop.permute.xlu0 %862
    %v865 = vmul.f32 %v858, %v863
    %867 = vrot.lane.b32.xlu0 %v865, 32
    %v868 = vpop.permute.xlu0 %867
    %v870 = vadd.f32 %v860, %v868
    %v871 = vtanh.pop %v870
    %873 = vrot.lane.b32.xlu0 %v871, 64
    %v874 = vpop.permute.xlu0 %873
    %v876 = vmul.f32 %v858, %v874
    %878 = vrot.lane.b32.xlu0 %v876, 32
    %v879 = vpop.permute.xlu0 %878
    %881 = vst.msk [vmem:[%s773] sm:$0xff] %vm440, %v879
    %882 = vst.msk [vmem:[%s771] sm:$0xff] %vm443, %v879
    %s883 = scalar_lea.vmem [#allocation2], 40
    %v884 = vld [vmem:[%s883] sm:$0xff]
    %s885 = scalar_lea.vmem [#allocation3], 16
    %v886 = vld [vmem:[%s885] sm:$0xff]
    %v887 = vadd.f32 %v884, %v886
    %v888 = vsel %vm68, %v879, 0
    %890 = vmatprep.subr.mxu0 0.0
    %891 = vmatpush1.msra.mxu0 %v330
    %892 = vmatprep.subr.mxu0 0.0
    %893 = vmatpush1.msra.mxu0 %v331
    %894 = vmatprep.subr.mxu0 0.0
    %895 = vmatpush1.msra.mxu0 %v332
    %896 = vmatprep.subr.mxu0 0.0
    %897 = vmatpush1.msra.mxu0 %v333
    %898 = vmatprep.subr.mxu0 0.0
    %899 = vmatpush1.msra.mxu0 0.0
    %900 = vmatprep.subr.mxu0 0.0
    %901 = vmatpush1.msra.mxu0 0.0
    %902 = vmatprep.subr.mxu0 0.0
    %903 = vmatpush1.msra.mxu0 0.0
    %904 = vmatprep.subr.mxu0 0.0
    %905 = vmatpush1.msra.mxu0 0.0
    %906 = vmatprep.subr.mxu0 0.0
    %907 = vmatpush1.msra.mxu0 0.0
    %908 = vmatprep.subr.mxu0 0.0
    %909 = vmatpush1.msra.mxu0 0.0
    %910 = vmatprep.subr.mxu0 0.0
    %911 = vmatpush1.msra.mxu0 0.0
    %912 = vmatprep.subr.mxu0 0.0
    %913 = vmatpush1.msra.mxu0 0.0
    %914 = vmatprep.subr.mxu0 0.0
    %915 = vmatpush1.msra.mxu0 0.0
    %916 = vmatprep.subr.mxu0 0.0
    %917 = vmatpush1.msra.mxu0 0.0
    %918 = vmatprep.subr.mxu0 0.0
    %919 = vmatpush1.msra.mxu0 0.0
    %920 = vmatprep.subr.mxu0 0.0
    %921 = vmatpush1.msra.mxu0 0.0
    %922 = vmatprep.subr.mxu0 0.0
    %923 = vmatpush1.msra.mxu0 0.0
    %924 = vmatprep.subr.mxu0 0.0
    %925 = vmatpush1.msra.mxu0 0.0
    %926 = vmatprep.subr.mxu0 0.0
    %927 = vmatpush1.msra.mxu0 0.0
    %928 = vmatprep.subr.mxu0 0.0
    %929 = vmatpush1.msra.mxu0 0.0
    %930 = vmatprep.subr.mxu0 0.0
    %931 = vmatpush1.msra.mxu0 0.0
    %932 = vmatprep.subr.mxu0 0.0
    %933 = vmatpush1.msra.mxu0 0.0
    %934 = vmatprep.subr.mxu0 0.0
    %935 = vmatpush1.msra.mxu0 0.0
    %936 = vmatprep.subr.mxu0 0.0
    %937 = vmatpush1.msra.mxu0 0.0
    %938 = vmatprep.subr.mxu0 0.0
    %939 = vmatpush1.msra.mxu0 0.0
    %940 = vmatprep.subr.mxu0 0.0
    %941 = vmatpush1.msra.mxu0 0.0
    %942 = vmatprep.subr.mxu0 0.0
    %943 = vmatpush1.msra.mxu0 0.0
    %944 = vmatprep.subr.mxu0 0.0
    %945 = vmatpush1.msra.mxu0 0.0
    %946 = vmatprep.subr.mxu0 0.0
    %947 = vmatpush1.msra.mxu0 0.0
    %948 = vmatprep.subr.mxu0 0.0
    %949 = vmatpush1.msra.mxu0 0.0
    %950 = vmatprep.subr.mxu0 0.0
    %951 = vmatpush1.msra.mxu0 0.0
    %952 = vmatprep.subr.mxu0 0.0
    %953 = vmatpush1.msra.mxu0 0.0
    %954 = vmatprep.mubr.f32.mxu0 0.0
    %955 = vmatmul.mubr.f32.gmra.mrb[0].mxu0 %v888
    %v956 = vpop.f32.mrb[0].mxu0
    %v957 = vadd.f32 0.0, %v956
    %v958 = vpop.f32.mrb[0].mxu0
    %959 = vdwg.mxu0
    %v960 = vadd.f32 %v887, %v957
    %v961 = vxor.u32 %v960, 2147483648
    %v962 = vmul.f32 %v961, 1.442695
    %v963 = vpow.pop %v962
    %v964 = vadd.f32 %v963, 1.0
    %v965 = vrcp.pop %v964
    %v966 = vmul.f32 1.0, %v965
    %v967 = vtanh.pop %v960
    %v968 = vmul.f32 %v966, %v870
    %970 = vrot.lane.b32.xlu0 %v967, 64
    %v971 = vpop.permute.xlu0 %970
    %v973 = vmul.f32 %v966, %v971
    %975 = vrot.lane.b32.xlu0 %v973, 32
    %v976 = vpop.permute.xlu0 %975
    %v978 = vadd.f32 %v968, %v976
    %v979 = vtanh.pop %v978
    %981 = vrot.lane.b32.xlu0 %v979, 64
    %v982 = vpop.permute.xlu0 %981
    %v984 = vmul.f32 %v966, %v982
    %986 = vrot.lane.b32.xlu0 %v984, 32
    %v987 = vpop.permute.xlu0 %986
    %989 = vst.msk [vmem:[%s663] sm:$0xff] %vm440, %v987
    %990 = vst.msk [vmem:[%s661] sm:$0xff] %vm443, %v987
    %s991 = scalar_lea.vmem [#allocation2], 48
    %v992 = vld [vmem:[%s991] sm:$0xff]
    %s993 = scalar_lea.vmem [#allocation3], 8
    %v994 = vld [vmem:[%s993] sm:$0xff]
    %v995 = vadd.f32 %v992, %v994
    %v996 = vsel %vm68, %v987, 0
    %998 = vmatprep.subr.mxu0 0.0
    %999 = vmatpush1.msra.mxu0 %v330
    %1000 = vmatprep.subr.mxu0 0.0
    %1001 = vmatpush1.msra.mxu0 %v331
    %1002 = vmatprep.subr.mxu0 0.0
    %1003 = vmatpush1.msra.mxu0 %v332
    %1004 = vmatprep.subr.mxu0 0.0
    %1005 = vmatpush1.msra.mxu0 %v333
    %1006 = vmatprep.subr.mxu0 0.0
    %1007 = vmatpush1.msra.mxu0 0.0
    %1008 = vmatprep.subr.mxu0 0.0
    %1009 = vmatpush1.msra.mxu0 0.0
    %1010 = vmatprep.subr.mxu0 0.0
    %1011 = vmatpush1.msra.mxu0 0.0
    %1012 = vmatprep.subr.mxu0 0.0
    %1013 = vmatpush1.msra.mxu0 0.0
    %1014 = vmatprep.subr.mxu0 0.0
    %1015 = vmatpush1.msra.mxu0 0.0
    %1016 = vmatprep.subr.mxu0 0.0
    %1017 = vmatpush1.msra.mxu0 0.0
    %1018 = vmatprep.subr.mxu0 0.0
    %1019 = vmatpush1.msra.mxu0 0.0
    %1020 = vmatprep.subr.mxu0 0.0
    %1021 = vmatpush1.msra.mxu0 0.0
    %1022 = vmatprep.subr.mxu0 0.0
    %1023 = vmatpush1.msra.mxu0 0.0
    %1024 = vmatprep.subr.mxu0 0.0
    %1025 = vmatpush1.msra.mxu0 0.0
    %1026 = vmatprep.subr.mxu0 0.0
    %1027 = vmatpush1.msra.mxu0 0.0
    %1028 = vmatprep.subr.mxu0 0.0
    %1029 = vmatpush1.msra.mxu0 0.0
    %1030 = vmatprep.subr.mxu0 0.0
    %1031 = vmatpush1.msra.mxu0 0.0
    %1032 = vmatprep.subr.mxu0 0.0
    %1033 = vmatpush1.msra.mxu0 0.0
    %1034 = vmatprep.subr.mxu0 0.0
    %1035 = vmatpush1.msra.mxu0 0.0
    %1036 = vmatprep.subr.mxu0 0.0
    %1037 = vmatpush1.msra.mxu0 0.0
    %1038 = vmatprep.subr.mxu0 0.0
    %1039 = vmatpush1.msra.mxu0 0.0
    %1040 = vmatprep.subr.mxu0 0.0
    %1041 = vmatpush1.msra.mxu0 0.0
    %1042 = vmatprep.subr.mxu0 0.0
    %1043 = vmatpush1.msra.mxu0 0.0
    %1044 = vmatprep.subr.mxu0 0.0
    %1045 = vmatpush1.msra.mxu0 0.0
    %1046 = vmatprep.subr.mxu0 0.0
    %1047 = vmatpush1.msra.mxu0 0.0
    %1048 = vmatprep.subr.mxu0 0.0
    %1049 = vmatpush1.msra.mxu0 0.0
    %1050 = vmatprep.subr.mxu0 0.0
    %1051 = vmatpush1.msra.mxu0 0.0
    %1052 = vmatprep.subr.mxu0 0.0
    %1053 = vmatpush1.msra.mxu0 0.0
    %1054 = vmatprep.subr.mxu0 0.0
    %1055 = vmatpush1.msra.mxu0 0.0
    %1056 = vmatprep.subr.mxu0 0.0
    %1057 = vmatpush1.msra.mxu0 0.0
    %1058 = vmatprep.subr.mxu0 0.0
    %1059 = vmatpush1.msra.mxu0 0.0
    %1060 = vmatprep.subr.mxu0 0.0
    %1061 = vmatpush1.msra.mxu0 0.0
    %1062 = vmatprep.mubr.f32.mxu0 0.0
    %1063 = vmatmul.mubr.f32.gmra.mrb[0].mxu0 %v996
    %v1064 = vpop.f32.mrb[0].mxu0
    %v1065 = vadd.f32 0.0, %v1064
    %v1066 = vpop.f32.mrb[0].mxu0
    %1067 = vdwg.mxu0
    %v1068 = vadd.f32 %v995, %v1065
    %v1069 = vxor.u32 %v1068, 2147483648
    %v1070 = vmul.f32 %v1069, 1.442695
    %v1071 = vpow.pop %v1070
    %v1072 = vadd.f32 %v1071, 1.0
    %v1073 = vrcp.pop %v1072
    %v1074 = vmul.f32 1.0, %v1073
    %v1075 = vtanh.pop %v1068
    %v1076 = vmul.f32 %v1074, %v978
    %1078 = vrot.lane.b32.xlu0 %v1075, 64
    %v1079 = vpop.permute.xlu0 %1078
    %v1081 = vmul.f32 %v1074, %v1079
    %1083 = vrot.lane.b32.xlu0 %v1081, 32
    %v1084 = vpop.permute.xlu0 %1083
    %v1086 = vadd.f32 %v1076, %v1084
    %v1087 = vtanh.pop %v1086
    %1089 = vrot.lane.b32.xlu0 %v1087, 64
    %v1090 = vpop.permute.xlu0 %1089
    %v1092 = vmul.f32 %v1074, %v1090
    %1094 = vrot.lane.b32.xlu0 %v1092, 32
    %v1095 = vpop.permute.xlu0 %1094
    %1097 = vst.msk [vmem:[%s553] sm:$0xff] %vm440, %v1095
    %1098 = vst.msk [vmem:[%s551] sm:$0xff] %vm443, %v1095
    %s1099 = scalar_lea.vmem [#allocation2], 56
    %v1100 = vld [vmem:[%s1099] sm:$0xff]
    %v1101 = vld [vmem:[#allocation3] sm:$0xff]
    %v1102 = vadd.f32 %v1100, %v1101
    %v1103 = vsel %vm68, %v1095, 0
    %1105 = vmatprep.subr.mxu0 0.0
    %1106 = vmatpush1.msra.mxu0 %v330
    %1107 = vmatprep.subr.mxu0 0.0
    %1108 = vmatpush1.msra.mxu0 %v331
    %1109 = vmatprep.subr.mxu0 0.0
    %1110 = vmatpush1.msra.mxu0 %v332
    %1111 = vmatprep.subr.mxu0 0.0
    %1112 = vmatpush1.msra.mxu0 %v333
    %1113 = vmatprep.subr.mxu0 0.0
    %1114 = vmatpush1.msra.mxu0 0.0
    %1115 = vmatprep.subr.mxu0 0.0
    %1116 = vmatpush1.msra.mxu0 0.0
    %1117 = vmatprep.subr.mxu0 0.0
    %1118 = vmatpush1.msra.mxu0 0.0
    %1119 = vmatprep.subr.mxu0 0.0
    %1120 = vmatpush1.msra.mxu0 0.0
    %1121 = vmatprep.subr.mxu0 0.0
    %1122 = vmatpush1.msra.mxu0 0.0
    %1123 = vmatprep.subr.mxu0 0.0
    %1124 = vmatpush1.msra.mxu0 0.0
    %1125 = vmatprep.subr.mxu0 0.0
    %1126 = vmatpush1.msra.mxu0 0.0
    %1127 = vmatprep.subr.mxu0 0.0
    %1128 = vmatpush1.msra.mxu0 0.0
    %1129 = vmatprep.subr.mxu0 0.0
    %1130 = vmatpush1.msra.mxu0 0.0
    %1131 = vmatprep.subr.mxu0 0.0
    %1132 = vmatpush1.msra.mxu0 0.0
    %1133 = vmatprep.subr.mxu0 0.0
    %1134 = vmatpush1.msra.mxu0 0.0
    %1135 = vmatprep.subr.mxu0 0.0
    %1136 = vmatpush1.msra.mxu0 0.0
    %1137 = vmatprep.subr.mxu0 0.0
    %1138 = vmatpush1.msra.mxu0 0.0
    %1139 = vmatprep.subr.mxu0 0.0
    %1140 = vmatpush1.msra.mxu0 0.0
    %1141 = vmatprep.subr.mxu0 0.0
    %1142 = vmatpush1.msra.mxu0 0.0
    %1143 = vmatprep.subr.mxu0 0.0
    %1144 = vmatpush1.msra.mxu0 0.0
    %1145 = vmatprep.subr.mxu0 0.0
    %1146 = vmatpush1.msra.mxu0 0.0
    %1147 = vmatprep.subr.mxu0 0.0
    %1148 = vmatpush1.msra.mxu0 0.0
    %1149 = vmatprep.subr.mxu0 0.0
    %1150 = vmatpush1.msra.mxu0 0.0
    %1151 = vmatprep.subr.mxu0 0.0
    %1152 = vmatpush1.msra.mxu0 0.0
    %1153 = vmatprep.subr.mxu0 0.0
    %1154 = vmatpush1.msra.mxu0 0.0
    %1155 = vmatprep.subr.mxu0 0.0
    %1156 = vmatpush1.msra.mxu0 0.0
    %1157 = vmatprep.subr.mxu0 0.0
    %1158 = vmatpush1.msra.mxu0 0.0
    %1159 = vmatprep.subr.mxu0 0.0
    %1160 = vmatpush1.msra.mxu0 0.0
    %1161 = vmatprep.subr.mxu0 0.0
    %1162 = vmatpush1.msra.mxu0 0.0
    %1163 = vmatprep.subr.mxu0 0.0
    %1164 = vmatpush1.msra.mxu0 0.0
    %1165 = vmatprep.subr.mxu0 0.0
    %1166 = vmatpush1.msra.mxu0 0.0
    %1167 = vmatprep.subr.mxu0 0.0
    %1168 = vmatpush1.msra.mxu0 0.0
    %1169 = vmatprep.mubr.f32.mxu0 0.0
    %1170 = vmatmul.mubr.f32.gmra.mrb[0].mxu0 %v1103
    %v1171 = vpop.f32.mrb[0].mxu0
    %v1172 = vadd.f32 0.0, %v1171
    %v1173 = vpop.f32.mrb[0].mxu0
    %1174 = vdwg.mxu0
    %v1175 = vadd.f32 %v1102, %v1172
    %v1176 = vxor.u32 %v1175, 2147483648
    %v1177 = vmul.f32 %v1176, 1.442695
    %v1178 = vpow.pop %v1177
    %v1179 = vadd.f32 %v1178, 1.0
    %v1180 = vrcp.pop %v1179
    %v1181 = vmul.f32 1.0, %v1180
    %v1182 = vtanh.pop %v1175
    %v1183 = vmul.f32 %v1181, %v1086
    %1185 = vrot.lane.b32.xlu0 %v1182, 64
    %v1186 = vpop.permute.xlu0 %1185
    %v1188 = vmul.f32 %v1181, %v1186
    %1190 = vrot.lane.b32.xlu0 %v1188, 32
    %v1191 = vpop.permute.xlu0 %1190
    %v1193 = vadd.f32 %v1183, %v1191
    %v1194 = vtanh.pop %v1193
    %1196 = vrot.lane.b32.xlu0 %v1194, 64
    %v1197 = vpop.permute.xlu0 %1196
    %v1199 = vmul.f32 %v1181, %v1197
    %1201 = vrot.lane.b32.xlu0 %v1199, 32
    %v1202 = vpop.permute.xlu0 %1201
    %1204 = vst.msk [vmem:[%s442] sm:$0xff] %vm440, %v1202
    %1205 = vst.msk [vmem:[#allocation4] sm:$0xff] %vm443, %v1202
    %v1206 = vld [vmem:[#allocation4] sm:$0xff]
    %v1207 = vld [vmem:[#allocation4 + $0x8] sm:$0xff]
    %v1208 = vld [vmem:[#allocation4 + $0x10] sm:$0xff]
    %v1209 = vld [vmem:[#allocation4 + $0x18] sm:$0xff]
    %v1210 = vld [vmem:[#allocation4 + $0x20] sm:$0xff]
    %v1211 = vld [vmem:[#allocation4 + $0x28] sm:$0xff]
    %v1212 = vld [vmem:[#allocation4 + $0x30] sm:$0xff]
    %v1213 = vld [vmem:[#allocation4 + $0x38] sm:$0xff]
    %v1214 = vmax.f32 %v1206, 0.0
    %v1215 = vmax.f32 %v1207, 0.0
    %v1216 = vmax.f32 %v1208, 0.0
    %v1217 = vmax.f32 %v1209, 0.0
    %v1218 = vmax.f32 %v1210, 0.0
    %v1219 = vmax.f32 %v1211, 0.0
    %v1220 = vmax.f32 %v1212, 0.0
    %v1221 = vmax.f32 %v1213, 0.0
    %vm1222 = vcmp.ne.f32.partialorder %v1206, %v1206
    %vm1223 = vcmp.ne.f32.partialorder %v1207, %v1207
    %vm1224 = vcmp.ne.f32.partialorder %v1208, %v1208
    %vm1225 = vcmp.ne.f32.partialorder %v1209, %v1209
    %vm1226 = vcmp.ne.f32.partialorder %v1210, %v1210
    %vm1227 = vcmp.ne.f32.partialorder %v1211, %v1211
    %vm1228 = vcmp.ne.f32.partialorder %v1212, %v1212
    %vm1229 = vcmp.ne.f32.partialorder %v1213, %v1213
    %v1230 = vadd.f32 %v1206, 0.0
    %v1231 = vadd.f32 %v1207, 0.0
    %v1232 = vadd.f32 %v1208, 0.0
    %v1233 = vadd.f32 %v1209, 0.0
    %v1234 = vadd.f32 %v1210, 0.0
    %v1235 = vadd.f32 %v1211, 0.0
    %v1236 = vadd.f32 %v1212, 0.0
    %v1237 = vadd.f32 %v1213, 0.0
    %v1238 = vand.u32 2147483647, %v1206
    %v1239 = vand.u32 2147483647, %v1207
    %v1240 = vand.u32 2147483647, %v1208
    %v1241 = vand.u32 2147483647, %v1209
    %v1242 = vand.u32 2147483647, %v1210
    %v1243 = vand.u32 2147483647, %v1211
    %v1244 = vand.u32 2147483647, %v1212
    %v1245 = vand.u32 2147483647, %v1213
    %v1246 = vsub.f32 0.0, %v1238
    %v1247 = vsub.f32 0.0, %v1239
    %v1248 = vsub.f32 0.0, %v1240
    %v1249 = vsub.f32 0.0, %v1241
    %v1250 = vsub.f32 0.0, %v1242
    %v1251 = vsub.f32 0.0, %v1243
    %v1252 = vsub.f32 0.0, %v1244
    %v1253 = vsub.f32 0.0, %v1245
    %v1254 = vmul.f32 %v1246, 1.442695
    %v1255 = vpow.pop %v1254
    %v1256 = vmul.f32 %v1247, 1.442695
    %v1257 = vpow.pop %v1256
    %v1258 = vmul.f32 %v1248, 1.442695
    %v1259 = vpow.pop %v1258
    %v1260 = vmul.f32 %v1249, 1.442695
    %v1261 = vpow.pop %v1260
    %v1262 = vmul.f32 %v1250, 1.442695
    %v1263 = vpow.pop %v1262
    %v1264 = vmul.f32 %v1251, 1.442695
    %v1265 = vpow.pop %v1264
    %v1266 = vmul.f32 %v1252, 1.442695
    %v1267 = vpow.pop %v1266
    %v1268 = vmul.f32 %v1253, 1.442695
    %v1269 = vpow.pop %v1268
    %v1270 = vadd.f32 %v1255, 1.0
    %v1271 = vlog2.pop %v1270
    %v1272 = vmul.f32 %v1271, 0.6931472
    %v1273 = vmul.f32 -0.5, %v1255
    %v1274 = vadd.f32 %v1273, 1.0
    %v1275 = vmul.f32 %v1274, %v1255
    %v1276 = vand.u32 2147483647, %v1255
    %vm1277 = vcmp.lt.f32.partialorder %v1276, 0.0004427343
    %v1278 = vsel %vm1277, %v1275, %v1272
    %v1279 = vadd.f32 %v1257, 1.0
    %v1280 = vlog2.pop %v1279
    %v1281 = vmul.f32 %v1280, 0.6931472
    %v1282 = vmul.f32 -0.5, %v1257
    %v1283 = vadd.f32 %v1282, 1.0
    %v1284 = vmul.f32 %v1283, %v1257
    %v1285 = vand.u32 2147483647, %v1257
    %vm1286 = vcmp.lt.f32.partialorder %v1285, 0.0004427343
    %v1287 = vsel %vm1286, %v1284, %v1281
    %v1288 = vadd.f32 %v1259, 1.0
    %v1289 = vlog2.pop %v1288
    %v1290 = vmul.f32 %v1289, 0.6931472
    %v1291 = vmul.f32 -0.5, %v1259
    %v1292 = vadd.f32 %v1291, 1.0
    %v1293 = vmul.f32 %v1292, %v1259
    %v1294 = vand.u32 2147483647, %v1259
    %vm1295 = vcmp.lt.f32.partialorder %v1294, 0.0004427343
    %v1296 = vsel %vm1295, %v1293, %v1290
    %v1297 = vadd.f32 %v1261, 1.0
    %v1298 = vlog2.pop %v1297
    %v1299 = vmul.f32 %v1298, 0.6931472
    %v1300 = vmul.f32 -0.5, %v1261
    %v1301 = vadd.f32 %v1300, 1.0
    %v1302 = vmul.f32 %v1301, %v1261
    %v1303 = vand.u32 2147483647, %v1261
    %vm1304 = vcmp.lt.f32.partialorder %v1303, 0.0004427343
    %v1305 = vsel %vm1304, %v1302, %v1299
    %v1306 = vadd.f32 %v1263, 1.0
    %v1307 = vlog2.pop %v1306
    %v1308 = vmul.f32 %v1307, 0.6931472
    %v1309 = vmul.f32 -0.5, %v1263
    %v1310 = vadd.f32 %v1309, 1.0
    %v1311 = vmul.f32 %v1310, %v1263
    %v1312 = vand.u32 2147483647, %v1263
    %vm1313 = vcmp.lt.f32.partialorder %v1312, 0.0004427343
    %v1314 = vsel %vm1313, %v1311, %v1308
    %v1315 = vadd.f32 %v1265, 1.0
    %v1316 = vlog2.pop %v1315
    %v1317 = vmul.f32 %v1316, 0.6931472
    %v1318 = vmul.f32 -0.5, %v1265
    %v1319 = vadd.f32 %v1318, 1.0
    %v1320 = vmul.f32 %v1319, %v1265
    %v1321 = vand.u32 2147483647, %v1265
    %vm1322 = vcmp.lt.f32.partialorder %v1321, 0.0004427343
    %v1323 = vsel %vm1322, %v1320, %v1317
    %v1324 = vadd.f32 %v1267, 1.0
    %v1325 = vlog2.pop %v1324
    %v1326 = vmul.f32 %v1325, 0.6931472
    %v1327 = vmul.f32 -0.5, %v1267
    %v1328 = vadd.f32 %v1327, 1.0
    %v1329 = vmul.f32 %v1328, %v1267
    %v1330 = vand.u32 2147483647, %v1267
    %vm1331 = vcmp.lt.f32.partialorder %v1330, 0.0004427343
    %v1332 = vsel %vm1331, %v1329, %v1326
    %v1333 = vadd.f32 %v1269, 1.0
    %v1334 = vlog2.pop %v1333
    %v1335 = vmul.f32 %v1334, 0.6931472
    %v1336 = vmul.f32 -0.5, %v1269
    %v1337 = vadd.f32 %v1336, 1.0
    %v1338 = vmul.f32 %v1337, %v1269
    %v1339 = vand.u32 2147483647, %v1269
    %vm1340 = vcmp.lt.f32.partialorder %v1339, 0.0004427343
    %v1341 = vsel %vm1340, %v1338, %v1335
    %v1342 = vadd.f32 %v1214, %v1278
    %v1343 = vadd.f32 %v1215, %v1287
    %v1344 = vadd.f32 %v1216, %v1296
    %v1345 = vadd.f32 %v1217, %v1305
    %v1346 = vadd.f32 %v1218, %v1314
    %v1347 = vadd.f32 %v1219, %v1323
    %v1348 = vadd.f32 %v1220, %v1332
    %v1349 = vadd.f32 %v1221, %v1341
    %v1350 = vsel %vm1222, %v1230, %v1342
    %v1351 = vsel %vm1223, %v1231, %v1343
    %v1352 = vsel %vm1224, %v1232, %v1344
    %v1353 = vsel %vm1225, %v1233, %v1345
    %v1354 = vsel %vm1226, %v1234, %v1346
    %v1355 = vsel %vm1227, %v1235, %v1347
    %v1356 = vsel %vm1228, %v1236, %v1348
    %v1357 = vsel %vm1229, %v1237, %v1349
    %v1358 = vtanh.pop %v1350
    %v1359 = vtanh.pop %v1351
    %v1360 = vtanh.pop %v1352
    %v1361 = vtanh.pop %v1353
    %v1362 = vtanh.pop %v1354
    %v1363 = vtanh.pop %v1355
    %v1364 = vtanh.pop %v1356
    %v1365 = vtanh.pop %v1357
    %v1366 = vmul.f32 %v1206, %v1358
    %v1367 = vmul.f32 %v1207, %v1359
    %v1368 = vmul.f32 %v1208, %v1360
    %v1369 = vmul.f32 %v1209, %v1361
    %v1370 = vmul.f32 %v1210, %v1362
    %v1371 = vmul.f32 %v1211, %v1363
    %v1372 = vmul.f32 %v1212, %v1364
    %v1373 = vmul.f32 %v1213, %v1365
    %v1374 = vxor.u32 %v1206, 2147483648
    %v1375 = vxor.u32 %v1207, 2147483648
    %v1376 = vxor.u32 %v1208, 2147483648
    %v1377 = vxor.u32 %v1209, 2147483648
    %v1378 = vxor.u32 %v1210, 2147483648
    %v1379 = vxor.u32 %v1211, 2147483648
    %v1380 = vxor.u32 %v1212, 2147483648
    %v1381 = vxor.u32 %v1213, 2147483648
    %v1382 = vmul.f32 %v1374, 1.442695
    %v1383 = vpow.pop %v1382
    %v1384 = vmul.f32 %v1375, 1.442695
    %v1385 = vpow.pop %v1384
    %v1386 = vmul.f32 %v1376, 1.442695
    %v1387 = vpow.pop %v1386
    %v1388 = vmul.f32 %v1377, 1.442695
    %v1389 = vpow.pop %v1388
    %v1390 = vmul.f32 %v1378, 1.442695
    %v1391 = vpow.pop %v1390
    %v1392 = vmul.f32 %v1379, 1.442695
    %v1393 = vpow.pop %v1392
    %v1394 = vmul.f32 %v1380, 1.442695
    %v1395 = vpow.pop %v1394
    %v1396 = vmul.f32 %v1381, 1.442695
    %v1397 = vpow.pop %v1396
    %v1398 = vadd.f32 %v1383, 1.0
    %v1399 = vadd.f32 %v1385, 1.0
    %v1400 = vadd.f32 %v1387, 1.0
    %v1401 = vadd.f32 %v1389, 1.0
    %v1402 = vadd.f32 %v1391, 1.0
    %v1403 = vadd.f32 %v1393, 1.0
    %v1404 = vadd.f32 %v1395, 1.0
    %v1405 = vadd.f32 %v1397, 1.0
    %v1406 = vrcp.pop %v1398
    %v1407 = vmul.f32 1.0, %v1406
    %v1408 = vrcp.pop %v1399
    %v1409 = vmul.f32 1.0, %v1408
    %v1410 = vrcp.pop %v1400
    %v1411 = vmul.f32 1.0, %v1410
    %v1412 = vrcp.pop %v1401
    %v1413 = vmul.f32 1.0, %v1412
    %v1414 = vrcp.pop %v1402
    %v1415 = vmul.f32 1.0, %v1414
    %v1416 = vrcp.pop %v1403
    %v1417 = vmul.f32 1.0, %v1416
    %v1418 = vrcp.pop %v1404
    %v1419 = vmul.f32 1.0, %v1418
    %v1420 = vrcp.pop %v1405
    %v1421 = vmul.f32 1.0, %v1420
    %v1422 = vadd.f32 %v1366, %v1407
    %v1423 = vadd.f32 %v1367, %v1409
    %v1424 = vadd.f32 %v1368, %v1411
    %v1425 = vadd.f32 %v1369, %v1413
    %v1426 = vadd.f32 %v1370, %v1415
    %v1427 = vadd.f32 %v1371, %v1417
    %v1428 = vadd.f32 %v1372, %v1419
    %v1429 = vadd.f32 %v1373, %v1421
    %v1430 = vtanh.pop %v1206
    %v1431 = vtanh.pop %v1207
    %v1432 = vtanh.pop %v1208
    %v1433 = vtanh.pop %v1209
    %v1434 = vtanh.pop %v1210
    %v1435 = vtanh.pop %v1211
    %v1436 = vtanh.pop %v1212
    %v1437 = vtanh.pop %v1213
    %v1438 = vadd.f32 %v1422, %v1430
    %v1439 = vadd.f32 %v1423, %v1431
    %v1440 = vadd.f32 %v1424, %v1432
    %v1441 = vadd.f32 %v1425, %v1433
    %v1442 = vadd.f32 %v1426, %v1434
    %v1443 = vadd.f32 %v1427, %v1435
    %v1444 = vadd.f32 %v1428, %v1436
    %v1445 = vadd.f32 %v1429, %v1437
    %v1446 = vsel %vm68, %v1438, 0.0
    %1447 = vadd.xlane.f32.xlu0 %v1446
    %v1448 = vpop.xlane.xlu0 %1447
    %v1449 = vsel %vm68, %v1439, 0.0
    %1450 = vadd.xlane.f32.xlu0 %v1449
    %v1451 = vpop.xlane.xlu0 %1450
    %v1452 = vsel %vm68, %v1440, 0.0
    %1453 = vadd.xlane.f32.xlu0 %v1452
    %v1454 = vpop.xlane.xlu0 %1453
    %v1455 = vsel %vm68, %v1441, 0.0
    %1456 = vadd.xlane.f32.xlu0 %v1455
    %v1457 = vpop.xlane.xlu0 %1456
    %v1458 = vsel %vm68, %v1442, 0.0
    %1459 = vadd.xlane.f32.xlu0 %v1458
    %v1460 = vpop.xlane.xlu0 %1459
    %v1461 = vsel %vm68, %v1443, 0.0
    %1462 = vadd.xlane.f32.xlu0 %v1461
    %v1463 = vpop.xlane.xlu0 %1462
    %v1464 = vsel %vm68, %v1444, 0.0
    %1465 = vadd.xlane.f32.xlu0 %v1464
    %v1466 = vpop.xlane.xlu0 %1465
    %v1467 = vsel %vm68, %v1445, 0.0
    %1468 = vadd.xlane.f32.xlu0 %v1467
    %v1469 = vpop.xlane.xlu0 %1468
    %v1470 = vrcp.pop 32.0
    %v1471 = vmul.f32 %v1448, %v1470
    %v1472 = vmul.f32 %v1451, %v1470
    %v1473 = vmul.f32 %v1454, %v1470
    %v1474 = vmul.f32 %v1457, %v1470
    %v1475 = vmul.f32 %v1460, %v1470
    %v1476 = vmul.f32 %v1463, %v1470
    %v1477 = vmul.f32 %v1466, %v1470
    %v1478 = vmul.f32 %v1469, %v1470
    %v1479 = vsub.f32 %v1438, %v1471
    %v1480 = vsub.f32 %v1439, %v1472
    %v1481 = vsub.f32 %v1440, %v1473
    %v1482 = vsub.f32 %v1441, %v1474
    %v1483 = vsub.f32 %v1442, %v1475
    %v1484 = vsub.f32 %v1443, %v1476
    %v1485 = vsub.f32 %v1444, %v1477
    %v1486 = vsub.f32 %v1445, %v1478
    %v1487 = vmul.f32 %v1479, %v1479
    %v1488 = vmul.f32 %v1480, %v1480
    %v1489 = vmul.f32 %v1481, %v1481
    %v1490 = vmul.f32 %v1482, %v1482
    %v1491 = vmul.f32 %v1483, %v1483
    %v1492 = vmul.f32 %v1484, %v1484
    %v1493 = vmul.f32 %v1485, %v1485
    %v1494 = vmul.f32 %v1486, %v1486
    %v1495 = vsel %vm68, %v1487, 0.0
    %1496 = vadd.xlane.f32.xlu0 %v1495
    %v1497 = vpop.xlane.xlu0 %1496
    %v1498 = vsel %vm68, %v1488, 0.0
    %1499 = vadd.xlane.f32.xlu0 %v1498
    %v1500 = vpop.xlane.xlu0 %1499
    %v1501 = vsel %vm68, %v1489, 0.0
    %1502 = vadd.xlane.f32.xlu0 %v1501
    %v1503 = vpop.xlane.xlu0 %1502
    %v1504 = vsel %vm68, %v1490, 0.0
    %1505 = vadd.xlane.f32.xlu0 %v1504
    %v1506 = vpop.xlane.xlu0 %1505
    %v1507 = vsel %vm68, %v1491, 0.0
    %1508 = vadd.xlane.f32.xlu0 %v1507
    %v1509 = vpop.xlane.xlu0 %1508
    %v1510 = vsel %vm68, %v1492, 0.0
    %1511 = vadd.xlane.f32.xlu0 %v1510
    %v1512 = vpop.xlane.xlu0 %1511
    %v1513 = vsel %vm68, %v1493, 0.0
    %1514 = vadd.xlane.f32.xlu0 %v1513
    %v1515 = vpop.xlane.xlu0 %1514
    %v1516 = vsel %vm68, %v1494, 0.0
    %1517 = vadd.xlane.f32.xlu0 %v1516
    %v1518 = vpop.xlane.xlu0 %1517
    %v1519 = vmul.f32 %v1497, %v1470
    %v1520 = vmul.f32 %v1500, %v1470
    %v1521 = vmul.f32 %v1503, %v1470
    %v1522 = vmul.f32 %v1506, %v1470
    %v1523 = vmul.f32 %v1509, %v1470
    %v1524 = vmul.f32 %v1512, %v1470
    %v1525 = vmul.f32 %v1515, %v1470
    %v1526 = vmul.f32 %v1518, %v1470
    %v1527 = vadd.f32 %v1519, 1e-05
    %v1528 = vadd.f32 %v1520, 1e-05
    %v1529 = vadd.f32 %v1521, 1e-05
    %v1530 = vadd.f32 %v1522, 1e-05
    %v1531 = vadd.f32 %v1523, 1e-05
    %v1532 = vadd.f32 %v1524, 1e-05
    %v1533 = vadd.f32 %v1525, 1e-05
    %v1534 = vadd.f32 %v1526, 1e-05
    %v1535 = vrsqrt.pop %v1527
    %v1536 = vrsqrt.pop %v1528
    %v1537 = vrsqrt.pop %v1529
    %v1538 = vrsqrt.pop %v1530
    %v1539 = vrsqrt.pop %v1531
    %v1540 = vrsqrt.pop %v1532
    %v1541 = vrsqrt.pop %v1533
    %v1542 = vrsqrt.pop %v1534
    %v1543 = vmul.f32 %v1479, %v1535
    %v1544 = vmul.f32 %v1480, %v1536
    %v1545 = vmul.f32 %v1481, %v1537
    %v1546 = vmul.f32 %v1482, %v1538
    %v1547 = vmul.f32 %v1483, %v1539
    %v1548 = vmul.f32 %v1484, %v1540
    %v1549 = vmul.f32 %v1485, %v1541
    %v1550 = vmul.f32 %v1486, %v1542
    %v1551 = vld [vmem:[%s7] sm:$0x1]
    %v1553 = vlaneseq
    %v1554 = vshrl.u32 %v1553, 7
    %v1555 = vsub.s32 0, %v1554
    %v1556 = vrot.slane %v1551, %v1555
    %v1558 = vmul.f32 %v1543, %v1556
    %v1559 = vmul.f32 %v1544, %v1556
    %v1560 = vmul.f32 %v1545, %v1556
    %v1561 = vmul.f32 %v1546, %v1556
    %v1562 = vmul.f32 %v1547, %v1556
    %v1563 = vmul.f32 %v1548, %v1556
    %v1564 = vmul.f32 %v1549, %v1556
    %v1565 = vmul.f32 %v1550, %v1556
    %v1566 = vld [vmem:[%s8] sm:$0x1]
    %v1568 = vlaneseq
    %v1569 = vshrl.u32 %v1568, 7
    %v1570 = vsub.s32 0, %v1569
    %v1571 = vrot.slane %v1566, %v1570
    %v1573 = vadd.f32 %v1558, %v1571
    %v1574 = vadd.f32 %v1559, %v1571
    %v1575 = vadd.f32 %v1560, %v1571
    %v1576 = vadd.f32 %v1561, %v1571
    %v1577 = vadd.f32 %v1562, %v1571
    %v1578 = vadd.f32 %v1563, %v1571
    %v1579 = vadd.f32 %v1564, %v1571
    %v1580 = vadd.f32 %v1565, %v1571
    %v1581 = vld [vmem:[%s9] sm:$0xff]
    %v1582 = vld [vmem:[%s9 + $0x8] sm:$0xff]
    %v1583 = vld [vmem:[%s9 + $0x10] sm:$0xff]
    %v1584 = vld [vmem:[%s9 + $0x18] sm:$0xff]
    %v1585 = vld [vmem:[%s10] sm:$0x1]
    %v1587 = vlaneseq
    %v1588 = vshrl.u32 %v1587, 7
    %v1589 = vsub.s32 0, %v1588
    %v1590 = vrot.slane %v1585, %v1589
    %v1593 = vsel %vm68, %v1573, 0
    %v1596 = vsel %vm68, %v1574, 0
    %v1599 = vsel %vm68, %v1575, 0
    %v1602 = vsel %vm68, %v1576, 0
    %v1605 = vsel %vm68, %v1577, 0
    %v1608 = vsel %vm68, %v1578, 0
    %v1611 = vsel %vm68, %v1579, 0
    %v1614 = vsel %vm68, %v1580, 0
    %1616 = vmatprep.subr.mxu0 0.0
    %1617 = vmatpush1.msra.mxu0 %v1581
    %1618 = vmatprep.subr.mxu0 0.0
    %1619 = vmatpush1.msra.mxu0 %v1582
    %1620 = vmatprep.subr.mxu0 0.0
    %1621 = vmatpush1.msra.mxu0 %v1583
    %1622 = vmatprep.subr.mxu0 0.0
    %1623 = vmatpush1.msra.mxu0 %v1584
    %1624 = vmatprep.subr.mxu0 0.0
    %1625 = vmatpush1.msra.mxu0 0.0
    %1626 = vmatprep.subr.mxu0 0.0
    %1627 = vmatpush1.msra.mxu0 0.0
    %1628 = vmatprep.subr.mxu0 0.0
    %1629 = vmatpush1.msra.mxu0 0.0
    %1630 = vmatprep.subr.mxu0 0.0
    %1631 = vmatpush1.msra.mxu0 0.0
    %1632 = vmatprep.subr.mxu0 0.0
    %1633 = vmatpush1.msra.mxu0 0.0
    %1634 = vmatprep.subr.mxu0 0.0
    %1635 = vmatpush1.msra.mxu0 0.0
    %1636 = vmatprep.subr.mxu0 0.0
    %1637 = vmatpush1.msra.mxu0 0.0
    %1638 = vmatprep.subr.mxu0 0.0
    %1639 = vmatpush1.msra.mxu0 0.0
    %1640 = vmatprep.subr.mxu0 0.0
    %1641 = vmatpush1.msra.mxu0 0.0
    %1642 = vmatprep.subr.mxu0 0.0
    %1643 = vmatpush1.msra.mxu0 0.0
    %1644 = vmatprep.subr.mxu0 0.0
    %1645 = vmatpush1.msra.mxu0 0.0
    %1646 = vmatprep.subr.mxu0 0.0
    %1647 = vmatpush1.msra.mxu0 0.0
    %1648 = vmatprep.subr.mxu0 0.0
    %1649 = vmatpush1.msra.mxu0 0.0
    %1650 = vmatprep.subr.mxu0 0.0
    %1651 = vmatpush1.msra.mxu0 0.0
    %1652 = vmatprep.subr.mxu0 0.0
    %1653 = vmatpush1.msra.mxu0 0.0
    %1654 = vmatprep.subr.mxu0 0.0
    %1655 = vmatpush1.msra.mxu0 0.0
    %1656 = vmatprep.subr.mxu0 0.0
    %1657 = vmatpush1.msra.mxu0 0.0
    %1658 = vmatprep.subr.mxu0 0.0
    %1659 = vmatpush1.msra.mxu0 0.0
    %1660 = vmatprep.subr.mxu0 0.0
    %1661 = vmatpush1.msra.mxu0 0.0
    %1662 = vmatprep.subr.mxu0 0.0
    %1663 = vmatpush1.msra.mxu0 0.0
    %1664 = vmatprep.subr.mxu0 0.0
    %1665 = vmatpush1.msra.mxu0 0.0
    %1666 = vmatprep.subr.mxu0 0.0
    %1667 = vmatpush1.msra.mxu0 0.0
    %1668 = vmatprep.subr.mxu0 0.0
    %1669 = vmatpush1.msra.mxu0 0.0
    %1670 = vmatprep.subr.mxu0 0.0
    %1671 = vmatpush1.msra.mxu0 0.0
    %1672 = vmatprep.subr.mxu0 0.0
    %1673 = vmatpush1.msra.mxu0 0.0
    %1674 = vmatprep.subr.mxu0 0.0
    %1675 = vmatpush1.msra.mxu0 0.0
    %1676 = vmatprep.subr.mxu0 0.0
    %1677 = vmatpush1.msra.mxu0 0.0
    %1678 = vmatprep.subr.mxu0 0.0
    %1679 = vmatpush1.msra.mxu0 0.0
    %1680 = vmatprep.mubr.f32.mxu0 0.0
    %1681 = vmatmul.mubr.f32.gmra.mrb[0].mxu0 %v1593
    %v1682 = vpop.f32.mrb[0].mxu0
    %v1683 = vadd.f32 %v1590, %v1682
    %v1684 = vpop.f32.mrb[0].mxu0
    %1685 = vmatprep.mubr.f32.mxu0 0.0
    %1686 = vmatmul.mubr.f32.gmra.mrb[0].mxu0 %v1596
    %v1687 = vpop.f32.mrb[0].mxu0
    %v1688 = vadd.f32 %v1590, %v1687
    %v1689 = vpop.f32.mrb[0].mxu0
    %1690 = vmatprep.mubr.f32.mxu0 0.0
    %1691 = vmatmul.mubr.f32.gmra.mrb[0].mxu0 %v1599
    %v1692 = vpop.f32.mrb[0].mxu0
    %v1693 = vadd.f32 %v1590, %v1692
    %v1694 = vpop.f32.mrb[0].mxu0
    %1695 = vmatprep.mubr.f32.mxu0 0.0
    %1696 = vmatmul.mubr.f32.gmra.mrb[0].mxu0 %v1602
    %v1697 = vpop.f32.mrb[0].mxu0
    %v1698 = vadd.f32 %v1590, %v1697
    %v1699 = vpop.f32.mrb[0].mxu0
    %1700 = vmatprep.mubr.f32.mxu0 0.0
    %1701 = vmatmul.mubr.f32.gmra.mrb[0].mxu0 %v1605
    %v1702 = vpop.f32.mrb[0].mxu0
    %v1703 = vadd.f32 %v1590, %v1702
    %v1704 = vpop.f32.mrb[0].mxu0
    %1705 = vmatprep.mubr.f32.mxu0 0.0
    %1706 = vmatmul.mubr.f32.gmra.mrb[0].mxu0 %v1608
    %v1707 = vpop.f32.mrb[0].mxu0
    %v1708 = vadd.f32 %v1590, %v1707
    %v1709 = vpop.f32.mrb[0].mxu0
    %1710 = vmatprep.mubr.f32.mxu0 0.0
    %1711 = vmatmul.mubr.f32.gmra.mrb[0].mxu0 %v1611
    %v1712 = vpop.f32.mrb[0].mxu0
    %v1713 = vadd.f32 %v1590, %v1712
    %v1714 = vpop.f32.mrb[0].mxu0
    %1715 = vmatprep.mubr.f32.mxu0 0.0
    %1716 = vmatmul.mubr.f32.gmra.mrb[0].mxu0 %v1614
    %v1717 = vpop.f32.mrb[0].mxu0
    %v1718 = vadd.f32 %v1590, %v1717
    %v1719 = vpop.f32.mrb[0].mxu0
    %1720 = vdwg.mxu0
    %v1721 = vtanh.pop %v1683
    %v1722 = vtanh.pop %v1688
    %v1723 = vtanh.pop %v1693
    %v1724 = vtanh.pop %v1698
    %v1725 = vtanh.pop %v1703
    %v1726 = vtanh.pop %v1708
    %v1727 = vtanh.pop %v1713
    %v1728 = vtanh.pop %v1718
    %v1729 = vld [vmem:[%s11] sm:$0x1]
    %v1731 = vlaneseq
    %v1732 = vshrl.u32 %v1731, 7
    %v1733 = vsub.s32 0, %v1732
    %v1734 = vrot.slane %v1729, %v1733
    %v1736 = vmul.f32 %v1721, %v1734
    %v1737 = vmul.f32 %v1722, %v1734
    %v1738 = vmul.f32 %v1723, %v1734
    %v1739 = vmul.f32 %v1724, %v1734
    %v1740 = vmul.f32 %v1725, %v1734
    %v1741 = vmul.f32 %v1726, %v1734
    %v1742 = vmul.f32 %v1727, %v1734
    %v1743 = vmul.f32 %v1728, %v1734
    %v1744 = vsel %vm68, %v1736, 0.0
    %1745 = vadd.xlane.f32.xlu0 %v1744
    %v1746 = vpop.xlane.xlu0 %1745
    %v1747 = vsel %vm68, %v1737, 0.0
    %1748 = vadd.xlane.f32.xlu0 %v1747
    %v1749 = vpop.xlane.xlu0 %1748
    %v1750 = vsel %vm68, %v1738, 0.0
    %1751 = vadd.xlane.f32.xlu0 %v1750
    %v1752 = vpop.xlane.xlu0 %1751
    %v1753 = vsel %vm68, %v1739, 0.0
    %1754 = vadd.xlane.f32.xlu0 %v1753
    %v1755 = vpop.xlane.xlu0 %1754
    %v1756 = vsel %vm68, %v1740, 0.0
    %1757 = vadd.xlane.f32.xlu0 %v1756
    %v1758 = vpop.xlane.xlu0 %1757
    %v1759 = vsel %vm68, %v1741, 0.0
    %1760 = vadd.xlane.f32.xlu0 %v1759
    %v1761 = vpop.xlane.xlu0 %1760
    %v1762 = vsel %vm68, %v1742, 0.0
    %1763 = vadd.xlane.f32.xlu0 %v1762
    %v1764 = vpop.xlane.xlu0 %1763
    %v1765 = vsel %vm68, %v1743, 0.0
    %1766 = vadd.xlane.f32.xlu0 %v1765
    %v1767 = vpop.xlane.xlu0 %1766
    %v1768 = vld [vmem:[#allocation5] sm:$0x1]
    %v1770 = vlaneseq
    %v1771 = vshrl.u32 %v1770, 7
    %v1772 = vsub.s32 0, %v1771
    %v1773 = vrot.slane %v1768, %v1772
    %v1775 = vadd.f32 %v1746, %v1773
    %v1776 = vadd.f32 %v1749, %v1773
    %v1777 = vadd.f32 %v1752, %v1773
    %v1778 = vadd.f32 %v1755, %v1773
    %v1779 = vadd.f32 %v1758, %v1773
    %v1780 = vadd.f32 %v1761, %v1773
    %v1781 = vadd.f32 %v1764, %v1773
    %v1782 = vadd.f32 %v1767, %v1773
    %v1783 = vld [vmem:[%s1] sm:$0xff]
    %v1784 = vld [vmem:[%s1 + $0x8] sm:$0xff]
    %v1785 = vld [vmem:[%s1 + $0x10] sm:$0xff]
    %v1786 = vld [vmem:[%s1 + $0x18] sm:$0xff]
    %v1787 = vld [vmem:[%s1 + $0x20] sm:$0xff]
    %v1788 = vld [vmem:[%s1 + $0x28] sm:$0xff]
    %v1789 = vld [vmem:[%s1 + $0x30] sm:$0xff]
    %v1790 = vld [vmem:[%s1 + $0x38] sm:$0xff]
    %vm1791 = vcmp.gt.f32.partialorder %v1783, 0.0
    %vm1792 = vcmp.gt.f32.partialorder %v1784, 0.0
    %vm1793 = vcmp.gt.f32.partialorder %v1785, 0.0
    %vm1794 = vcmp.gt.f32.partialorder %v1786, 0.0
    %vm1795 = vcmp.gt.f32.partialorder %v1787, 0.0
    %vm1796 = vcmp.gt.f32.partialorder %v1788, 0.0
    %vm1797 = vcmp.gt.f32.partialorder %v1789, 0.0
    %vm1798 = vcmp.gt.f32.partialorder %v1790, 0.0
    %v1799 = vsel %vm1791, %v1775, -inf
    %v1800 = vsel %vm1792, %v1776, -inf
    %v1801 = vsel %vm1793, %v1777, -inf
    %v1802 = vsel %vm1794, %v1778, -inf
    %v1803 = vsel %vm1795, %v1779, -inf
    %v1804 = vsel %vm1796, %v1780, -inf
    %v1805 = vsel %vm1797, %v1781, -inf
    %v1806 = vsel %vm1798, %v1782, -inf
    %vm1807 = vcmask 7168
    %v1808 = vsel %vm1807, %v1799, -inf
    %v1809 = vsel %vm1807, %v1800, -inf
    %v1810 = vsel %vm1807, %v1801, -inf
    %v1811 = vsel %vm1807, %v1802, -inf
    %v1812 = vsel %vm1807, %v1803, -inf
    %v1813 = vmax.f32 %v1808, %v1812
    %v1814 = vsel %vm1807, %v1804, -inf
    %v1815 = vmax.f32 %v1809, %v1814
    %v1816 = vsel %vm1807, %v1805, -inf
    %v1817 = vmax.f32 %v1810, %v1816
    %v1818 = vsel %vm1807, %v1806, -inf
    %v1819 = vmax.f32 %v1811, %v1818
    %v1820 = vmax.f32 %v1813, %v1815
    %v1821 = vmax.f32 %v1817, %v1819
    %v1822 = vmax.f32 %v1820, %v1821
    %v1823 = vsub.f32 %v1799, %v1822
    %v1824 = vsub.f32 %v1800, %v1822
    %v1825 = vsub.f32 %v1801, %v1822
    %v1826 = vsub.f32 %v1802, %v1822
    %v1827 = vsub.f32 %v1803, %v1822
    %v1828 = vsub.f32 %v1804, %v1822
    %v1829 = vsub.f32 %v1805, %v1822
    %v1830 = vsub.f32 %v1806, %v1822
    %v1831 = vmul.f32 %v1823, 1.442695
    %v1832 = vpow.pop %v1831
    %v1833 = vmul.f32 %v1824, 1.442695
    %v1834 = vpow.pop %v1833
    %v1835 = vmul.f32 %v1825, 1.442695
    %v1836 = vpow.pop %v1835
    %v1837 = vmul.f32 %v1826, 1.442695
    %v1838 = vpow.pop %v1837
    %v1839 = vmul.f32 %v1827, 1.442695
    %v1840 = vpow.pop %v1839
    %v1841 = vmul.f32 %v1828, 1.442695
    %v1842 = vpow.pop %v1841
    %v1843 = vmul.f32 %v1829, 1.442695
    %v1844 = vpow.pop %v1843
    %v1845 = vmul.f32 %v1830, 1.442695
    %v1846 = vpow.pop %v1845
    %v1847 = vsel %vm1807, %v1832, 0.0
    %v1848 = vsel %vm1807, %v1834, 0.0
    %v1849 = vadd.f32 %v1847, %v1848
    %v1850 = vsel %vm1807, %v1836, 0.0
    %v1851 = vadd.f32 %v1849, %v1850
    %v1852 = vsel %vm1807, %v1838, 0.0
    %v1853 = vadd.f32 %v1851, %v1852
    %v1854 = vsel %vm1807, %v1840, 0.0
    %v1855 = vadd.f32 %v1853, %v1854
    %v1856 = vsel %vm1807, %v1842, 0.0
    %v1857 = vadd.f32 %v1855, %v1856
    %v1858 = vsel %vm1807, %v1844, 0.0
    %v1859 = vadd.f32 %v1857, %v1858
    %v1860 = vsel %vm1807, %v1846, 0.0
    %v1861 = vadd.f32 %v1859, %v1860
    %v1862 = vrcp.pop %v1861
    %v1863 = vmul.f32 %v1832, %v1862
    %v1864 = vmul.f32 %v1834, %v1862
    %v1865 = vmul.f32 %v1836, %v1862
    %v1866 = vmul.f32 %v1838, %v1862
    %v1867 = vmul.f32 %v1840, %v1862
    %v1868 = vmul.f32 %v1842, %v1862
    %v1869 = vmul.f32 %v1844, %v1862
    %v1870 = vmul.f32 %v1846, %v1862
    %1871 = vst.msk [vmem:[%s14] sm:$0xff] %vm1807, %v1863
    %1872 = vst.msk [vmem:[%s14 + $0x8] sm:$0xff] %vm1807, %v1864
    %1873 = vst.msk [vmem:[%s14 + $0x10] sm:$0xff] %vm1807, %v1865
    %1874 = vst.msk [vmem:[%s14 + $0x18] sm:$0xff] %vm1807, %v1866
    %1875 = vst.msk [vmem:[%s14 + $0x20] sm:$0xff] %vm1807, %v1867
    %1876 = vst.msk [vmem:[%s14 + $0x28] sm:$0xff] %vm1807, %v1868
    %1877 = vst.msk [vmem:[%s14 + $0x30] sm:$0xff] %vm1807, %v1869
    %1878 = vst.msk [vmem:[%s14 + $0x38] sm:$0xff] %vm1807, %v1870
    %1880 = vset.pattern.permute.xlu0 0
    %1881 = vperm.xlu0 %1880, %v1863
    %v1882 = vpop.permute.xlu0 %1881
    %1885 = vset.pattern.permute.xlu0 0
    %1886 = vperm.xlu0 %1885, %v1864
    %v1887 = vpop.permute.xlu0 %1886
    %1890 = vset.pattern.permute.xlu0 0
    %1891 = vperm.xlu0 %1890, %v1865
    %v1892 = vpop.permute.xlu0 %1891
    %1895 = vset.pattern.permute.xlu0 0
    %1896 = vperm.xlu0 %1895, %v1866
    %v1897 = vpop.permute.xlu0 %1896
    %1900 = vset.pattern.permute.xlu0 0
    %1901 = vperm.xlu0 %1900, %v1867
    %v1902 = vpop.permute.xlu0 %1901
    %1905 = vset.pattern.permute.xlu0 0
    %1906 = vperm.xlu0 %1905, %v1868
    %v1907 = vpop.permute.xlu0 %1906
    %1910 = vset.pattern.permute.xlu0 0
    %1911 = vperm.xlu0 %1910, %v1869
    %v1912 = vpop.permute.xlu0 %1911
    %1915 = vset.pattern.permute.xlu0 0
    %1916 = vperm.xlu0 %1915, %v1870
    %v1917 = vpop.permute.xlu0 %1916
    %v1919 = vmul.f32 %v1573, %v1882
    %v1920 = vmul.f32 %v1574, %v1887
    %v1921 = vmul.f32 %v1575, %v1892
    %v1922 = vmul.f32 %v1576, %v1897
    %v1923 = vmul.f32 %v1577, %v1902
    %v1924 = vmul.f32 %v1578, %v1907
    %v1925 = vmul.f32 %v1579, %v1912
    %v1926 = vmul.f32 %v1580, %v1917
    %v1927 = vsel %vm68, %v1919, 0.0
    %v1928 = vsel %vm68, %v1920, 0.0
    %v1929 = vadd.f32 %v1927, %v1928
    %v1930 = vsel %vm68, %v1921, 0.0
    %v1931 = vadd.f32 %v1929, %v1930
    %v1932 = vsel %vm68, %v1922, 0.0
    %v1933 = vadd.f32 %v1931, %v1932
    %v1934 = vsel %vm68, %v1923, 0.0
    %v1935 = vadd.f32 %v1933, %v1934
    %v1936 = vsel %vm68, %v1924, 0.0
    %v1937 = vadd.f32 %v1935, %v1936
    %v1938 = vsel %vm68, %v1925, 0.0
    %v1939 = vadd.f32 %v1937, %v1938
    %v1940 = vsel %vm68, %v1926, 0.0
    %v1941 = vadd.f32 %v1939, %v1940
    %1942 = vst.msk [vmem:[#allocation6] sm:$0xff] %vm68, %v1941
    // Predicated region
    $region54: #{tpu_custom_call.1} parent=1 // pred_check
      _
    $region55: #{tpu_custom_call.1} parent=1 // pred_check_branch
      %1944 = sbr.rel (0) target = $region57
    $region56: #{tpu_custom_call.1} parent=1 // pred_region
      %s1946 = ssub.s32 128, 128
      %1947 = vsyncadd [#allocation7], %s1946
      %s1949 = sshll.u32 [#allocation6], 4
      %s1950 = int_to_ptr.vmem [resolvable:$true] %s1949
      %1952 = dma.vmem_to_hbm [thread:$0]  %s1950, 128, %s13, [#allocation7]
    $region57: #{tpu_custom_call.1} parent=1 // pred_fallthru
      _
    // Predicated region
    $region58: #{tpu_custom_call.1} parent=1 // pred_check
      _
    $region59: #{tpu_custom_call.1} parent=1 // pred_check_branch
      %1954 = sbr.rel (0) target = $region61
    $region60: #{tpu_custom_call.1} parent=1 // pred_region
      _
    $region61: #{tpu_custom_call.1} parent=1 // pred_fallthru
      _
    // Predicated region
    $region62: #{tpu_custom_call.1} parent=1 // pred_check
      _
    $region63: #{tpu_custom_call.1} parent=1 // pred_check_branch
      %1956 = sbr.rel (0) target = $region65
    $region64: #{tpu_custom_call.1} parent=1 // pred_region
      %1957 = dma.done [#allocation7], 128
    $region65: #{tpu_custom_call.1} parent=1 // pred_fallthru
      _
    // Predicated region
    $region66: #{tpu_custom_call.1} parent=1 // pred_check
      _
    $region67: #{tpu_custom_call.1} parent=1 // pred_check_branch
      %1959 = sbr.rel (0) target = $region69
    $region68: #{tpu_custom_call.1} parent=1 // pred_region
      _
    $region69: #{tpu_custom_call.1} parent=1 // pred_fallthru
      _
    %1960 = vsyncpa [#allocation7], 1

</llo_original>
